<compile_context>
chip_gen: v5e
topology: v5e:2x2
jax: 0.10.0
libtpu: 0.0.40
codegen_flags: <defaults>
</compile_context>

<pallas_src>
import functools

import jax
import jax.numpy as jnp
import numpy as np
from jax import lax
from jax.experimental import pallas as pl
from jax.experimental.pallas import tpu as pltpu

EMB_DIM = 300
XP_DIM = 12
XP2_DIM = 29          # "input_shape" in the PyTorch module
HIDDEN = 32
NUM_LAYERS = 1
NUM_CLASSES = 5
GATES = 4 * HIDDEN    # 128 -> exactly one lane-width


# ----------------- Phase A: frame-independent gate projection -----------------
def _phase_a_kernel(xeg_ref, xpc_ref, wp_ref, bp_ref, wihp_ref, bg_ref, gx_ref):
    """gates_x = emb_proj[ids] + relu([xp|xp2]@blockdiag(w1,w2)+[b1|b2]) @ [wih_p1;wih_p2] + bg."""
    p = jnp.dot(xpc_ref[...], wp_ref[...],
                preferred_element_type=jnp.float32) + bp_ref[...]
    # TODO(synk): training-mode dropout (p=0.5) omitted -> identity (eval semantics).
    p = jnp.maximum(p, 0.0).astype(jnp.bfloat16)
    gx_ref[...] = (xeg_ref[...].astype(jnp.float32)
                   + jnp.dot(p, wihp_ref[...], preferred_element_type=jnp.float32)
                   + bg_ref[...])


# ----------------- Phase B: LSTM recurrence + final fc5 -----------------
def _phase_b_kernel(gx_ref, whh_ref, w5_ref, b5_ref, y_ref, h_scr, c_scr,
                    *, tchunk, n_frames):
    H = HIDDEN
    c_idx = pl.program_id(1)

    @pl.when(c_idx == 0)
    def _():
        h_scr[...] = jnp.zeros_like(h_scr)
        c_scr[...] = jnp.zeros_like(c_scr)

    whh = whh_ref[...]                       # (H, 4H), held across the chunk

    def step(i, carry):
        h, c = carry
        gates = gx_ref[i] + jnp.dot(h, whh, preferred_element_type=jnp.float32)
        # PyTorch LSTM gate order: input, forget, cell(g), output.
        i_g = jax.nn.sigmoid(gates[:, 0:H])
        f_g = jax.nn.sigmoid(gates[:, H:2 * H])
        g_g = jnp.tanh(gates[:, 2 * H:3 * H])
        o_g = jax.nn.sigmoid(gates[:, 3 * H:4 * H])
        c_new = f_g * c + i_g * g_g
        h_new = o_g * jnp.tanh(c_new)
        valid = (c_idx * tchunk + i) < n_frames     # mask zero-padded frames
        h_new = jnp.where(valid, h_new, h)
        c_new = jnp.where(valid, c_new, c)
        return h_new, c_new

    # bounded unroll (<= 16 steps per grid invocation)
    h_f, c_f = lax.fori_loop(0, tchunk, step, (h_scr[...], c_scr[...]), unroll=True)
    h_scr[...] = h_f
    c_scr[...] = c_f

    @pl.when(c_idx == pl.num_programs(1) - 1)
    def _():
        y_ref[...] = (jnp.dot(h_f, w5_ref[...], preferred_element_type=jnp.float32)
                      + b5_ref[...])


# ----------------- parameter folding (one-time, outside the forward) -----------------
def fold_params(params):
    f32 = jnp.float32
    # gather-then-matmul == matmul-then-gather: fold emb @ wih_e into the table.
    emb_proj = jnp.dot(params["emb"].astype(f32), params["wih_e"].astype(f32))
    wp = jnp.zeros((XP_DIM + XP2_DIM, 2 * XP_DIM), f32)
    wp = wp.at[:XP_DIM, :XP_DIM].set(params["w1"])
    wp = wp.at[XP_DIM:, XP_DIM:].set(params["w2"])
    return {
        "emb_proj": emb_proj.astype(jnp.bfloat16),                              # (V+1, 4H)
        "wp":   wp.astype(jnp.bfloat16),                                        # (41, 24)
        "bp":   jnp.concatenate([params["b1"], params["b2"]], axis=1).astype(f32),  # (1, 24)
        "wihp": jnp.concatenate([params["wih_p1"], params["wih_p2"]],
                                axis=0).astype(jnp.bfloat16),                   # (24, 4H)
        "bg":   params["bg"].astype(f32),
        "whh":  params["whh"].astype(f32),
        "w5":   params["w5"].astype(f32),
        "b5":   params["b5"].astype(f32),
    }


@jax.jit
def move_predict_forward(x_ids, xp, xp2, xi, fp):
    """JAX/Pallas equivalent of MovePredict.forward(x, xp, xp2, xi)."""
    del xi  # xi is only reshaped (view(1,1,1)) in the reference, never used.
    B, F = x_ids.shape

    Bp0 = max(8, ((B + 7) // 8) * 8)
    BT = min(Bp0, 128)                          # batch tile ("parallel" axis, 2 TCs on v7x)
    Bp = ((Bp0 + BT - 1) // BT) * BT
    NB = Bp // BT
    TCHUNK = min(F, 16)                         # frames per Phase-B grid step
    F_pad = ((F + TCHUNK - 1) // TCHUNK) * TCHUNK
    NCHUNK = F_pad // TCHUNK
    Ntot = F_pad * Bp

    # Frame-major gathers; the 300-wide embedding never materializes (128-wide emb_proj).
    ids_t = jnp.pad(jnp.transpose(x_ids), ((0, F_pad - F), (0, Bp - B)))
    xe_g = fp["emb_proj"][ids_t].reshape(Ntot, GATES)                 # (Ntot,128) bf16

    xpc = jnp.concatenate([xp, xp2], axis=-1)                          # (B,F,41)
    xpc = jnp.transpose(xpc, (1, 0, 2))
    xpc = jnp.pad(xpc, ((0, F_pad - F), (0, Bp - B), (0, 0)))
    xpc = xpc.astype(jnp.bfloat16).reshape(Ntot, XP_DIM + XP2_DIM)     # (Ntot,41) bf16

    # -------- Phase A: row-tiled, pipelined, fully parallel over rows --------
    row_tile = 8
    for cand in (2048, 1024, 512, 256, 128, 64, 32, 16, 8):
        if Ntot % cand == 0:
            row_tile = cand
            break
    n_row_tiles = Ntot // row_tile

    def full2(shape):
        return pl.BlockSpec(shape, lambda i: (0, 0))

    gates_x = pl.pallas_call(
        _phase_a_kernel,
        out_shape=jax.ShapeDtypeStruct((Ntot, GATES), jnp.float32),
        grid=(n_row_tiles,),
        in_specs=[
            pl.BlockSpec((row_tile, GATES), lambda i: (i, 0)),             # emb_proj rows
            pl.BlockSpec((row_tile, XP_DIM + XP2_DIM), lambda i: (i, 0)),  # [xp|xp2]
            full2(fp["wp"].shape), full2(fp["bp"].shape),
            full2(fp["wihp"].shape), full2(fp["bg"].shape),
        ],
        out_specs=pl.BlockSpec((row_tile, GATES), lambda i: (i, 0)),
        compiler_params=pltpu.CompilerParams(
            dimension_semantics=("parallel",),
            vmem_limit_bytes=32 * 1024 * 1024),    # v7x-safe scoped-VMEM budget
    )(xe_g, xpc, fp["wp"], fp["bp"], fp["wihp"], fp["bg"])

    # -------- Phase B: serial recurrence, gates streamed per frame-chunk --------
    gx3 = gates_x.reshape(F_pad, Bp, GATES)

    def full3(shape):
        return pl.BlockSpec(shape, lambda b, c: (0, 0))

    y_pad = pl.pallas_call(
        functools.partial(_phase_b_kernel, tchunk=TCHUNK, n_frames=F),
        out_shape=jax.ShapeDtypeStruct((Bp, NUM_CLASSES), jnp.float32),
        grid=(NB, NCHUNK),
        in_specs=[
            pl.BlockSpec((TCHUNK, BT, GATES), lambda b, c: (c, b, 0)),
            full3(fp["whh"].shape), full3(fp["w5"].shape), full3(fp["b5"].shape),
        ],
        out_specs=pl.BlockSpec((BT, NUM_CLASSES), lambda b, c: (b, 0)),
        scratch_shapes=[pltpu.VMEM((BT, HIDDEN), jnp.float32),   # h
                        pltpu.VMEM((BT, HIDDEN), jnp.float32)],  # c
        compiler_params=pltpu.CompilerParams(
            dimension_semantics=("parallel", "arbitrary"),
            vmem_limit_bytes=32 * 1024 * 1024),
    )(gx3, fp["whh"], fp["w5"], fp["b5"])

    y = y_pad[:B]
    # reset_state(batch_size) -> zero initial states, returned alongside y.
    h0 = jnp.zeros((NUM_LAYERS, B, HIDDEN), jnp.float32)
    c0 = jnp.zeros((NUM_LAYERS, B, HIDDEN), jnp.float32)
    return y, h0, c0


def init_params(key, vocab_size):
    """Deterministic synthetic parameters (same shapes as the PyTorch module)."""
    ks = jax.random.split(key, 12)
    s = 0.1
    return {
        "emb":    jax.random.normal(ks[0], (vocab_size + 1, EMB_DIM), jnp.float32) * s,
        "w1":     jax.random.normal(ks[1], (XP_DIM, XP_DIM), jnp.float32) * s,       # fc1 12->12
        "b1":     jax.random.normal(ks[2], (1, XP_DIM), jnp.float32) * s,
        "w2":     jax.random.normal(ks[3], (XP2_DIM, XP_DIM), jnp.float32) * s,       # fc2 29->12
        "b2":     jax.random.normal(ks[4], (1, XP_DIM), jnp.float32) * s,
        # LSTM weight_ih (324, 4H) split by input block: emb(300) | xp(12) | xp2(12)
        "wih_e":  jax.random.normal(ks[5], (EMB_DIM, GATES), jnp.float32) * s,
        "wih_p1": jax.random.normal(ks[6], (XP_DIM, GATES), jnp.float32) * s,
        "wih_p2": jax.random.normal(ks[7], (XP_DIM, GATES), jnp.float32) * s,
        "whh":    jax.random.normal(ks[8], (HIDDEN, GATES), jnp.float32) * s,
        "bg":     jax.random.normal(ks[9], (1, GATES), jnp.float32) * s,  # b_ih + b_hh
        "w5":     jax.random.normal(ks[10], (HIDDEN, NUM_CLASSES), jnp.float32) * s,  # fc5
        "b5":     jax.random.normal(ks[11], (1, NUM_CLASSES), jnp.float32) * s,
    }


def reference_forward(x_ids, xp, xp2, params):
    """Pure-JAX f32 reference of the same forward pass (for validation)."""
    xe = params["emb"][x_ids]
    B, F, _ = xe.shape
    p1 = jax.nn.relu(xp.reshape(B * F, -1) @ params["w1"] + params["b1"])
    p2 = jax.nn.relu(xp2.reshape(B * F, -1) @ params["w2"] + params["b2"])
    xcat = jnp.concatenate([xe.reshape(B * F, -1), p1, p2], axis=-1).reshape(B, F, -1)
    wih = jnp.concatenate([params["wih_e"], params["wih_p1"], params["wih_p2"]], axis=0)
    H = HIDDEN
    h = jnp.zeros((B, H), jnp.float32)
    c = jnp.zeros((B, H), jnp.float32)
    for t in range(F):
        g = xcat[:, t] @ wih + h @ params["whh"] + params["bg"]
        i_g = jax.nn.sigmoid(g[:, :H])
        f_g = jax.nn.sigmoid(g[:, H:2 * H])
        g_g = jnp.tanh(g[:, 2 * H:3 * H])
        o_g = jax.nn.sigmoid(g[:, 3 * H:])
        c = f_g * c + i_g * g_g
        h = o_g * jnp.tanh(c)
    return h @ params["w5"] + params["b5"]


if __name__ == "__main__":
    B, F = 2, 8
    VOCAB = 50

    key = jax.random.PRNGKey(0)
    k_par, k_ids, k_xp, k_xp2 = jax.random.split(key, 4)
    params = init_params(k_par, VOCAB)
    folded = fold_params(params)

    x_ids = jax.random.randint(k_ids, (B, F), 0, VOCAB + 1, dtype=jnp.int32)
    xp = jax.random.normal(k_xp, (B, F, XP_DIM), jnp.float32)
    xp2 = jax.random.normal(k_xp2, (B, F, XP2_DIM), jnp.float32)
    xi = jnp.zeros((1,), jnp.float32)  # unused by the forward (only reshaped)

    y, h0, c0 = move_predict_forward(x_ids, xp, xp2, xi, folded)
    y = jax.block_until_ready(y)

    y_ref = reference_forward(x_ids, xp, xp2, params)
    # bf16 streamed operands -> relaxed tolerance vs. the f32 reference.
    np.testing.assert_allclose(np.asarray(y), np.asarray(y_ref), rtol=2e-2, atol=2e-2)
    assert y.shape == (B, NUM_CLASSES)
    assert h0.shape == (NUM_LAYERS, B, HIDDEN) and c0.shape == (NUM_LAYERS, B, HIDDEN)

    print("KERNEL_OK")
</pallas_src>

<mosaic_0001>
module attributes {stable_mosaic.version = 11 : i64} {
  func.func @_phase_a_kernel(%arg0: i32, %arg1: memref<64x128xbf16, #tpu.memory_space<vmem>>, %arg2: memref<64x41xbf16, #tpu.memory_space<vmem>>, %arg3: memref<41x24xbf16, #tpu.memory_space<vmem>>, %arg4: memref<1x24xf32, #tpu.memory_space<vmem>>, %arg5: memref<24x128xbf16, #tpu.memory_space<vmem>>, %arg6: memref<1x128xf32, #tpu.memory_space<vmem>>, %arg7: memref<64x128xf32, #tpu.memory_space<vmem>>) attributes {dimension_semantics = [#tpu.dimension_semantics<parallel>], iteration_bounds = array<i64: 1>, scalar_prefetch = 0 : i64, scratch_operands = 0 : i64, tpu.core_type = #tpu.core_type<tc>, window_params = [{transform_indices = @transform_0, window_bounds = array<i64: 64, 128>}, {transform_indices = @transform_1, window_bounds = array<i64: 64, 41>}, {pipeline_mode = #tpu.pipeline_mode<synchronous>, transform_indices = @transform_2, window_bounds = array<i64: 41, 24>}, {pipeline_mode = #tpu.pipeline_mode<synchronous>, transform_indices = @transform_3, window_bounds = array<i64: 1, 24>}, {pipeline_mode = #tpu.pipeline_mode<synchronous>, transform_indices = @transform_4, window_bounds = array<i64: 24, 128>}, {pipeline_mode = #tpu.pipeline_mode<synchronous>, transform_indices = @transform_5, window_bounds = array<i64: 1, 128>}, {transform_indices = @transform_6, window_bounds = array<i64: 64, 128>}]} {
    %c0 = arith.constant 0 : index
    %c0_0 = arith.constant 0 : index
    %0 = vector.load %arg2[%c0, %c0_0] : memref<64x41xbf16, #tpu.memory_space<vmem>>, vector<64x41xbf16>
    %c0_1 = arith.constant 0 : index
    %c0_2 = arith.constant 0 : index
    %1 = vector.load %arg3[%c0_1, %c0_2] : memref<41x24xbf16, #tpu.memory_space<vmem>>, vector<41x24xbf16>
    %cst = arith.constant dense<0.000000e+00> : vector<64x24xf32>
    %2 = tpu.matmul %0, %1, %cst {dimension_numbers = #tpu.dot_dimension_numbers<[1], [0], [0], [1], [0, 0, 1, 1], [], []>} : vector<64x41xbf16>, vector<41x24xbf16>, vector<64x24xf32> -> vector<64x24xf32>
    %c0_3 = arith.constant 0 : index
    %c0_4 = arith.constant 0 : index
    %3 = vector.load %arg4[%c0_3, %c0_4] : memref<1x24xf32, #tpu.memory_space<vmem>>, vector<1x24xf32>
    %4 = vector.broadcast %3 : vector<1x24xf32> to vector<64x24xf32>
    %5 = arith.addf %2, %4 : vector<64x24xf32>
    %cst_5 = arith.constant 0.000000e+00 : f32
    %6 = vector.broadcast %cst_5 : f32 to vector<64x24xf32>
    %7 = arith.maximumf %5, %6 : vector<64x24xf32>
    %8 = arith.truncf %7 : vector<64x24xf32> to vector<64x24xbf16>
    %c0_6 = arith.constant 0 : index
    %c0_7 = arith.constant 0 : index
    %9 = vector.load %arg1[%c0_6, %c0_7] : memref<64x128xbf16, #tpu.memory_space<vmem>>, vector<64x128xbf16>
    %10 = arith.extf %9 : vector<64x128xbf16> to vector<64x128xf32>
    %c0_8 = arith.constant 0 : index
    %c0_9 = arith.constant 0 : index
    %11 = vector.load %arg5[%c0_8, %c0_9] : memref<24x128xbf16, #tpu.memory_space<vmem>>, vector<24x128xbf16>
    %cst_10 = arith.constant dense<0.000000e+00> : vector<64x128xf32>
    %12 = tpu.matmul %8, %11, %cst_10 {dimension_numbers = #tpu.dot_dimension_numbers<[1], [0], [0], [1], [0, 0, 1, 1], [], []>} : vector<64x24xbf16>, vector<24x128xbf16>, vector<64x128xf32> -> vector<64x128xf32>
    %13 = arith.addf %10, %12 : vector<64x128xf32>
    %c0_11 = arith.constant 0 : index
    %c0_12 = arith.constant 0 : index
    %14 = vector.load %arg6[%c0_11, %c0_12] : memref<1x128xf32, #tpu.memory_space<vmem>>, vector<1x128xf32>
    %15 = vector.broadcast %14 : vector<1x128xf32> to vector<64x128xf32>
    %16 = arith.addf %13, %15 : vector<64x128xf32>
    %c0_13 = arith.constant 0 : index
    %c0_14 = arith.constant 0 : index
    %17 = vector.load %arg7[%c0_13, %c0_14] : memref<64x128xf32, #tpu.memory_space<vmem>>, vector<64x128xf32>
    tpu.vector_store %arg7[%c0_13, %c0_14], %16 {strides = array<i32>} : memref<64x128xf32, #tpu.memory_space<vmem>>, vector<64x128xf32>,
    return
  }
  func.func @transform_0(%arg0: i32) -> (i32, i32) {
    %c0_i32 = arith.constant 0 : i32
    %c0_i32_0 = arith.constant 0 : i32
    return %arg0, %c0_i32 : i32, i32
  }
  func.func @transform_1(%arg0: i32) -> (i32, i32) {
    %c0_i32 = arith.constant 0 : i32
    %c0_i32_0 = arith.constant 0 : i32
    return %arg0, %c0_i32 : i32, i32
  }
  func.func @transform_2(%arg0: i32) -> (i32, i32) {
    %c0_i32 = arith.constant 0 : i32
    %c0_i32_0 = arith.constant 0 : i32
    %c0_i32_1 = arith.constant 0 : i32
    return %c0_i32, %c0_i32_0 : i32, i32
  }
  func.func @transform_3(%arg0: i32) -> (i32, i32) {
    %c0_i32 = arith.constant 0 : i32
    %c0_i32_0 = arith.constant 0 : i32
    %c0_i32_1 = arith.constant 0 : i32
    return %c0_i32, %c0_i32_0 : i32, i32
  }
  func.func @transform_4(%arg0: i32) -> (i32, i32) {
    %c0_i32 = arith.constant 0 : i32
    %c0_i32_0 = arith.constant 0 : i32
    %c0_i32_1 = arith.constant 0 : i32
    return %c0_i32, %c0_i32_0 : i32, i32
  }
  func.func @transform_5(%arg0: i32) -> (i32, i32) {
    %c0_i32 = arith.constant 0 : i32
    %c0_i32_0 = arith.constant 0 : i32
    %c0_i32_1 = arith.constant 0 : i32
    return %c0_i32, %c0_i32_0 : i32, i32
  }
  func.func @transform_6(%arg0: i32) -> (i32, i32) {
    %c0_i32 = arith.constant 0 : i32
    %c0_i32_0 = arith.constant 0 : i32
    return %arg0, %c0_i32 : i32, i32
  }
}

module attributes {stable_mosaic.version = 11 : i64} {
  func.func @_phase_b_kernel(%arg0: i32, %arg1: i32, %arg2: memref<8x8x128xf32, #tpu.memory_space<vmem>>, %arg3: memref<32x128xf32, #tpu.memory_space<vmem>>, %arg4: memref<32x5xf32, #tpu.memory_space<vmem>>, %arg5: memref<1x5xf32, #tpu.memory_space<vmem>>, %arg6: memref<8x5xf32, #tpu.memory_space<vmem>>, %arg7: memref<8x32xf32, #tpu.memory_space<vmem>>, %arg8: memref<8x32xf32, #tpu.memory_space<vmem>>) attributes {dimension_semantics = [#tpu.dimension_semantics<parallel>, #tpu.dimension_semantics<arbitrary>], iteration_bounds = array<i64: 1, 1>, scalar_prefetch = 0 : i64, scratch_operands = 2 : i64, tpu.core_type = #tpu.core_type<tc>, window_params = [{transform_indices = @transform_0, window_bounds = array<i64: 8, 8, 128>}, {pipeline_mode = #tpu.pipeline_mode<synchronous>, transform_indices = @transform_1, window_bounds = array<i64: 32, 128>}, {pipeline_mode = #tpu.pipeline_mode<synchronous>, transform_indices = @transform_2, window_bounds = array<i64: 32, 5>}, {pipeline_mode = #tpu.pipeline_mode<synchronous>, transform_indices = @transform_3, window_bounds = array<i64: 1, 5>}, {transform_indices = @transform_4, window_bounds = array<i64: 8, 5>}]} {
    %c0_i32 = arith.constant 0 : i32
    %0 = arith.cmpi eq, %arg1, %c0_i32 : i32
    %1 = arith.extui %0 : i1 to i32
    %c0_i32_0 = arith.constant 0 : i32
    %2 = arith.cmpi ne, %1, %c0_i32_0 : i32
    scf.if %2 {
      %cst_76 = arith.constant 0.000000e+00 : f32
      %291 = vector.broadcast %cst_76 : f32 to vector<8x32xf32>
      %c0_77 = arith.constant 0 : index
      %c0_78 = arith.constant 0 : index
      %292 = vector.load %arg7[%c0_77, %c0_78] : memref<8x32xf32, #tpu.memory_space<vmem>>, vector<8x32xf32>
      tpu.vector_store %arg7[%c0_77, %c0_78], %291 {strides = array<i32>} : memref<8x32xf32, #tpu.memory_space<vmem>>, vector<8x32xf32>,
      %cst_79 = arith.constant 0.000000e+00 : f32
      %293 = vector.broadcast %cst_79 : f32 to vector<8x32xf32>
      %c0_80 = arith.constant 0 : index
      %c0_81 = arith.constant 0 : index
      %294 = vector.load %arg8[%c0_80, %c0_81] : memref<8x32xf32, #tpu.memory_space<vmem>>, vector<8x32xf32>
      tpu.vector_store %arg8[%c0_80, %c0_81], %293 {strides = array<i32>} : memref<8x32xf32, #tpu.memory_space<vmem>>, vector<8x32xf32>,
    } else {
    }
    %c0 = arith.constant 0 : index
    %c0_1 = arith.constant 0 : index
    %3 = vector.load %arg3[%c0, %c0_1] : memref<32x128xf32, #tpu.memory_space<vmem>>, vector<32x128xf32>
    %c0_2 = arith.constant 0 : index
    %c0_3 = arith.constant 0 : index
    %4 = vector.load %arg7[%c0_2, %c0_3] : memref<8x32xf32, #tpu.memory_space<vmem>>, vector<8x32xf32>
    %c0_4 = arith.constant 0 : index
    %c0_5 = arith.constant 0 : index
    %5 = vector.load %arg8[%c0_4, %c0_5] : memref<8x32xf32, #tpu.memory_space<vmem>>, vector<8x32xf32>
    %c0_i32_6 = arith.constant 0 : i32
    %6 = arith.index_cast %c0_i32_6 : i32 to index
    %c0_7 = arith.constant 0 : index
    %c0_8 = arith.constant 0 : index
    %7 = vector.load %arg2[%6, %c0_7, %c0_8] : memref<8x8x128xf32, #tpu.memory_space<vmem>>, vector<1x8x128xf32>
    %8 = vector.shape_cast %7 : vector<1x8x128xf32> to vector<8x128xf32>
    %cst = arith.constant dense<0.000000e+00> : vector<8x128xf32>
    %9 = tpu.matmul %4, %3, %cst {dimension_numbers = #tpu.dot_dimension_numbers<[1], [0], [0], [1], [0, 0, 1, 1], [], []>} : vector<8x32xf32>, vector<32x128xf32>, vector<8x128xf32> -> vector<8x128xf32>
    %10 = arith.addf %8, %9 : vector<8x128xf32>
    %11 = vector.extract_strided_slice %10 {offsets = [0, 0], sizes = [8, 32], strides = [1, 1]} : vector<8x128xf32> to vector<8x32xf32>
    %12 = arith.negf %11 : vector<8x32xf32>
    %13 = math.exp %12 : vector<8x32xf32>
    %cst_9 = arith.constant 1.000000e+00 : f32
    %14 = vector.broadcast %cst_9 : f32 to vector<8x32xf32>
    %15 = arith.addf %14, %13 : vector<8x32xf32>
    %16 = arith.divf %14, %15 : vector<8x32xf32>
    %17 = vector.extract_strided_slice %10 {offsets = [0, 32], sizes = [8, 32], strides = [1, 1]} : vector<8x128xf32> to vector<8x32xf32>
    %18 = arith.negf %17 : vector<8x32xf32>
    %19 = math.exp %18 : vector<8x32xf32>
    %cst_10 = arith.constant 1.000000e+00 : f32
    %20 = vector.broadcast %cst_10 : f32 to vector<8x32xf32>
    %21 = arith.addf %20, %19 : vector<8x32xf32>
    %22 = arith.divf %20, %21 : vector<8x32xf32>
    %23 = vector.extract_strided_slice %10 {offsets = [0, 64], sizes = [8, 32], strides = [1, 1]} : vector<8x128xf32> to vector<8x32xf32>
    %24 = math.tanh %23 : vector<8x32xf32>
    %25 = vector.extract_strided_slice %10 {offsets = [0, 96], sizes = [8, 32], strides = [1, 1]} : vector<8x128xf32> to vector<8x32xf32>
    %26 = arith.negf %25 : vector<8x32xf32>
    %27 = math.exp %26 : vector<8x32xf32>
    %cst_11 = arith.constant 1.000000e+00 : f32
    %28 = vector.broadcast %cst_11 : f32 to vector<8x32xf32>
    %29 = arith.addf %28, %27 : vector<8x32xf32>
    %30 = arith.divf %28, %29 : vector<8x32xf32>
    %31 = arith.mulf %22, %5 : vector<8x32xf32>
    %32 = arith.mulf %16, %24 : vector<8x32xf32>
    %33 = arith.addf %31, %32 : vector<8x32xf32>
    %34 = math.tanh %33 : vector<8x32xf32>
    %35 = arith.mulf %30, %34 : vector<8x32xf32>
    %c8_i32 = arith.constant 8 : i32
    %36 = arith.muli %arg1, %c8_i32 : i32
    %37 = arith.addi %36, %c0_i32_6 : i32
    %c8_i32_12 = arith.constant 8 : i32
    %38 = arith.cmpi slt, %37, %c8_i32_12 : i32
    %39 = arith.select %38, %35, %4 : vector<8x32xf32>
    %40 = arith.select %38, %33, %5 : vector<8x32xf32>
    %c1_i32 = arith.constant 1 : i32
    %41 = arith.index_cast %c1_i32 : i32 to index
    %c0_13 = arith.constant 0 : index
    %c0_14 = arith.constant 0 : index
    %42 = vector.load %arg2[%41, %c0_13, %c0_14] : memref<8x8x128xf32, #tpu.memory_space<vmem>>, vector<1x8x128xf32>
    %43 = vector.shape_cast %42 : vector<1x8x128xf32> to vector<8x128xf32>
    %cst_15 = arith.constant dense<0.000000e+00> : vector<8x128xf32>
    %44 = tpu.matmul %39, %3, %cst_15 {dimension_numbers = #tpu.dot_dimension_numbers<[1], [0], [0], [1], [0, 0, 1, 1], [], []>} : vector<8x32xf32>, vector<32x128xf32>, vector<8x128xf32> -> vector<8x128xf32>
    %45 = arith.addf %43, %44 : vector<8x128xf32>
    %46 = vector.extract_strided_slice %45 {offsets = [0, 0], sizes = [8, 32], strides = [1, 1]} : vector<8x128xf32> to vector<8x32xf32>
    %47 = arith.negf %46 : vector<8x32xf32>
    %48 = math.exp %47 : vector<8x32xf32>
    %cst_16 = arith.constant 1.000000e+00 : f32
    %49 = vector.broadcast %cst_16 : f32 to vector<8x32xf32>
    %50 = arith.addf %49, %48 : vector<8x32xf32>
    %51 = arith.divf %49, %50 : vector<8x32xf32>
    %52 = vector.extract_strided_slice %45 {offsets = [0, 32], sizes = [8, 32], strides = [1, 1]} : vector<8x128xf32> to vector<8x32xf32>
    %53 = arith.negf %52 : vector<8x32xf32>
    %54 = math.exp %53 : vector<8x32xf32>
    %cst_17 = arith.constant 1.000000e+00 : f32
    %55 = vector.broadcast %cst_17 : f32 to vector<8x32xf32>
    %56 = arith.addf %55, %54 : vector<8x32xf32>
    %57 = arith.divf %55, %56 : vector<8x32xf32>
    %58 = vector.extract_strided_slice %45 {offsets = [0, 64], sizes = [8, 32], strides = [1, 1]} : vector<8x128xf32> to vector<8x32xf32>
    %59 = math.tanh %58 : vector<8x32xf32>
    %60 = vector.extract_strided_slice %45 {offsets = [0, 96], sizes = [8, 32], strides = [1, 1]} : vector<8x128xf32> to vector<8x32xf32>
    %61 = arith.negf %60 : vector<8x32xf32>
    %62 = math.exp %61 : vector<8x32xf32>
    %cst_18 = arith.constant 1.000000e+00 : f32
    %63 = vector.broadcast %cst_18 : f32 to vector<8x32xf32>
    %64 = arith.addf %63, %62 : vector<8x32xf32>
    %65 = arith.divf %63, %64 : vector<8x32xf32>
    %66 = arith.mulf %57, %40 : vector<8x32xf32>
    %67 = arith.mulf %51, %59 : vector<8x32xf32>
    %68 = arith.addf %66, %67 : vector<8x32xf32>
    %69 = math.tanh %68 : vector<8x32xf32>
    %70 = arith.mulf %65, %69 : vector<8x32xf32>
    %c8_i32_19 = arith.constant 8 : i32
    %71 = arith.muli %arg1, %c8_i32_19 : i32
    %72 = arith.addi %71, %c1_i32 : i32
    %c8_i32_20 = arith.constant 8 : i32
    %73 = arith.cmpi slt, %72, %c8_i32_20 : i32
    %74 = arith.select %73, %70, %39 : vector<8x32xf32>
    %75 = arith.select %73, %68, %40 : vector<8x32xf32>
    %c2_i32 = arith.constant 2 : i32
    %76 = arith.index_cast %c2_i32 : i32 to index
    %c0_21 = arith.constant 0 : index
    %c0_22 = arith.constant 0 : index
    %77 = vector.load %arg2[%76, %c0_21, %c0_22] : memref<8x8x128xf32, #tpu.memory_space<vmem>>, vector<1x8x128xf32>
    %78 = vector.shape_cast %77 : vector<1x8x128xf32> to vector<8x128xf32>
    %cst_23 = arith.constant dense<0.000000e+00> : vector<8x128xf32>
    %79 = tpu.matmul %74, %3, %cst_23 {dimension_numbers = #tpu.dot_dimension_numbers<[1], [0], [0], [1], [0, 0, 1, 1], [], []>} : vector<8x32xf32>, vector<32x128xf32>, vector<8x128xf32> -> vector<8x128xf32>
    %80 = arith.addf %78, %79 : vector<8x128xf32>
    %81 = vector.extract_strided_slice %80 {offsets = [0, 0], sizes = [8, 32], strides = [1, 1]} : vector<8x128xf32> to vector<8x32xf32>
    %82 = arith.negf %81 : vector<8x32xf32>
    %83 = math.exp %82 : vector<8x32xf32>
    %cst_24 = arith.constant 1.000000e+00 : f32
    %84 = vector.broadcast %cst_24 : f32 to vector<8x32xf32>
    %85 = arith.addf %84, %83 : vector<8x32xf32>
    %86 = arith.divf %84, %85 : vector<8x32xf32>
    %87 = vector.extract_strided_slice %80 {offsets = [0, 32], sizes = [8, 32], strides = [1, 1]} : vector<8x128xf32> to vector<8x32xf32>
    %88 = arith.negf %87 : vector<8x32xf32>
    %89 = math.exp %88 : vector<8x32xf32>
    %cst_25 = arith.constant 1.000000e+00 : f32
    %90 = vector.broadcast %cst_25 : f32 to vector<8x32xf32>
    %91 = arith.addf %90, %89 : vector<8x32xf32>
    %92 = arith.divf %90, %91 : vector<8x32xf32>
    %93 = vector.extract_strided_slice %80 {offsets = [0, 64], sizes = [8, 32], strides = [1, 1]} : vector<8x128xf32> to vector<8x32xf32>
    %94 = math.tanh %93 : vector<8x32xf32>
    %95 = vector.extract_strided_slice %80 {offsets = [0, 96], sizes = [8, 32], strides = [1, 1]} : vector<8x128xf32> to vector<8x32xf32>
    %96 = arith.negf %95 : vector<8x32xf32>
    %97 = math.exp %96 : vector<8x32xf32>
    %cst_26 = arith.constant 1.000000e+00 : f32
    %98 = vector.broadcast %cst_26 : f32 to vector<8x32xf32>
    %99 = arith.addf %98, %97 : vector<8x32xf32>
    %100 = arith.divf %98, %99 : vector<8x32xf32>
    %101 = arith.mulf %92, %75 : vector<8x32xf32>
    %102 = arith.mulf %86, %94 : vector<8x32xf32>
    %103 = arith.addf %101, %102 : vector<8x32xf32>
    %104 = math.tanh %103 : vector<8x32xf32>
    %105 = arith.mulf %100, %104 : vector<8x32xf32>
    %c8_i32_27 = arith.constant 8 : i32
    %106 = arith.muli %arg1, %c8_i32_27 : i32
    %107 = arith.addi %106, %c2_i32 : i32
    %c8_i32_28 = arith.constant 8 : i32
    %108 = arith.cmpi slt, %107, %c8_i32_28 : i32
    %109 = arith.select %108, %105, %74 : vector<8x32xf32>
    %110 = arith.select %108, %103, %75 : vector<8x32xf32>
    %c3_i32 = arith.constant 3 : i32
    %111 = arith.index_cast %c3_i32 : i32 to index
    %c0_29 = arith.constant 0 : index
    %c0_30 = arith.constant 0 : index
    %112 = vector.load %arg2[%111, %c0_29, %c0_30] : memref<8x8x128xf32, #tpu.memory_space<vmem>>, vector<1x8x128xf32>
    %113 = vector.shape_cast %112 : vector<1x8x128xf32> to vector<8x128xf32>
    %cst_31 = arith.constant dense<0.000000e+00> : vector<8x128xf32>
    %114 = tpu.matmul %109, %3, %cst_31 {dimension_numbers = #tpu.dot_dimension_numbers<[1], [0], [0], [1], [0, 0, 1, 1], [], []>} : vector<8x32xf32>, vector<32x128xf32>, vector<8x128xf32> -> vector<8x128xf32>
    %115 = arith.addf %113, %114 : vector<8x128xf32>
    %116 = vector.extract_strided_slice %115 {offsets = [0, 0], sizes = [8, 32], strides = [1, 1]} : vector<8x128xf32> to vector<8x32xf32>
    %117 = arith.negf %116 : vector<8x32xf32>
    %118 = math.exp %117 : vector<8x32xf32>
    %cst_32 = arith.constant 1.000000e+00 : f32
    %119 = vector.broadcast %cst_32 : f32 to vector<8x32xf32>
    %120 = arith.addf %119, %118 : vector<8x32xf32>
    %121 = arith.divf %119, %120 : vector<8x32xf32>
    %122 = vector.extract_strided_slice %115 {offsets = [0, 32], sizes = [8, 32], strides = [1, 1]} : vector<8x128xf32> to vector<8x32xf32>
    %123 = arith.negf %122 : vector<8x32xf32>
    %124 = math.exp %123 : vector<8x32xf32>
    %cst_33 = arith.constant 1.000000e+00 : f32
    %125 = vector.broadcast %cst_33 : f32 to vector<8x32xf32>
    %126 = arith.addf %125, %124 : vector<8x32xf32>
    %127 = arith.divf %125, %126 : vector<8x32xf32>
    %128 = vector.extract_strided_slice %115 {offsets = [0, 64], sizes = [8, 32], strides = [1, 1]} : vector<8x128xf32> to vector<8x32xf32>
    %129 = math.tanh %128 : vector<8x32xf32>
    %130 = vector.extract_strided_slice %115 {offsets = [0, 96], sizes = [8, 32], strides = [1, 1]} : vector<8x128xf32> to vector<8x32xf32>
    %131 = arith.negf %130 : vector<8x32xf32>
    %132 = math.exp %131 : vector<8x32xf32>
    %cst_34 = arith.constant 1.000000e+00 : f32
    %133 = vector.broadcast %cst_34 : f32 to vector<8x32xf32>
    %134 = arith.addf %133, %132 : vector<8x32xf32>
    %135 = arith.divf %133, %134 : vector<8x32xf32>
    %136 = arith.mulf %127, %110 : vector<8x32xf32>
    %137 = arith.mulf %121, %129 : vector<8x32xf32>
    %138 = arith.addf %136, %137 : vector<8x32xf32>
    %139 = math.tanh %138 : vector<8x32xf32>
    %140 = arith.mulf %135, %139 : vector<8x32xf32>
    %c8_i32_35 = arith.constant 8 : i32
    %141 = arith.muli %arg1, %c8_i32_35 : i32
    %142 = arith.addi %141, %c3_i32 : i32
    %c8_i32_36 = arith.constant 8 : i32
    %143 = arith.cmpi slt, %142, %c8_i32_36 : i32
    %144 = arith.select %143, %140, %109 : vector<8x32xf32>
    %145 = arith.select %143, %138, %110 : vector<8x32xf32>
    %c4_i32 = arith.constant 4 : i32
    %146 = arith.index_cast %c4_i32 : i32 to index
    %c0_37 = arith.constant 0 : index
    %c0_38 = arith.constant 0 : index
    %147 = vector.load %arg2[%146, %c0_37, %c0_38] : memref<8x8x128xf32, #tpu.memory_space<vmem>>, vector<1x8x128xf32>
    %148 = vector.shape_cast %147 : vector<1x8x128xf32> to vector<8x128xf32>
    %cst_39 = arith.constant dense<0.000000e+00> : vector<8x128xf32>
    %149 = tpu.matmul %144, %3, %cst_39 {dimension_numbers = #tpu.dot_dimension_numbers<[1], [0], [0], [1], [0, 0, 1, 1], [], []>} : vector<8x32xf32>, vector<32x128xf32>, vector<8x128xf32> -> vector<8x128xf32>
    %150 = arith.addf %148, %149 : vector<8x128xf32>
    %151 = vector.extract_strided_slice %150 {offsets = [0, 0], sizes = [8, 32], strides = [1, 1]} : vector<8x128xf32> to vector<8x32xf32>
    %152 = arith.negf %151 : vector<8x32xf32>
    %153 = math.exp %152 : vector<8x32xf32>
    %cst_40 = arith.constant 1.000000e+00 : f32
    %154 = vector.broadcast %cst_40 : f32 to vector<8x32xf32>
    %155 = arith.addf %154, %153 : vector<8x32xf32>
    %156 = arith.divf %154, %155 : vector<8x32xf32>
    %157 = vector.extract_strided_slice %150 {offsets = [0, 32], sizes = [8, 32], strides = [1, 1]} : vector<8x128xf32> to vector<8x32xf32>
    %158 = arith.negf %157 : vector<8x32xf32>
    %159 = math.exp %158 : vector<8x32xf32>
    %cst_41 = arith.constant 1.000000e+00 : f32
    %160 = vector.broadcast %cst_41 : f32 to vector<8x32xf32>
    %161 = arith.addf %160, %159 : vector<8x32xf32>
    %162 = arith.divf %160, %161 : vector<8x32xf32>
    %163 = vector.extract_strided_slice %150 {offsets = [0, 64], sizes = [8, 32], strides = [1, 1]} : vector<8x128xf32> to vector<8x32xf32>
    %164 = math.tanh %163 : vector<8x32xf32>
    %165 = vector.extract_strided_slice %150 {offsets = [0, 96], sizes = [8, 32], strides = [1, 1]} : vector<8x128xf32> to vector<8x32xf32>
    %166 = arith.negf %165 : vector<8x32xf32>
    %167 = math.exp %166 : vector<8x32xf32>
    %cst_42 = arith.constant 1.000000e+00 : f32
    %168 = vector.broadcast %cst_42 : f32 to vector<8x32xf32>
    %169 = arith.addf %168, %167 : vector<8x32xf32>
    %170 = arith.divf %168, %169 : vector<8x32xf32>
    %171 = arith.mulf %162, %145 : vector<8x32xf32>
    %172 = arith.mulf %156, %164 : vector<8x32xf32>
    %173 = arith.addf %171, %172 : vector<8x32xf32>
    %174 = math.tanh %173 : vector<8x32xf32>
    %175 = arith.mulf %170, %174 : vector<8x32xf32>
    %c8_i32_43 = arith.constant 8 : i32
    %176 = arith.muli %arg1, %c8_i32_43 : i32
    %177 = arith.addi %176, %c4_i32 : i32
    %c8_i32_44 = arith.constant 8 : i32
    %178 = arith.cmpi slt, %177, %c8_i32_44 : i32
    %179 = arith.select %178, %175, %144 : vector<8x32xf32>
    %180 = arith.select %178, %173, %145 : vector<8x32xf32>
    %c5_i32 = arith.constant 5 : i32
    %181 = arith.index_cast %c5_i32 : i32 to index
    %c0_45 = arith.constant 0 : index
    %c0_46 = arith.constant 0 : index
    %182 = vector.load %arg2[%181, %c0_45, %c0_46] : memref<8x8x128xf32, #tpu.memory_space<vmem>>, vector<1x8x128xf32>
    %183 = vector.shape_cast %182 : vector<1x8x128xf32> to vector<8x128xf32>
    %cst_47 = arith.constant dense<0.000000e+00> : vector<8x128xf32>
    %184 = tpu.matmul %179, %3, %cst_47 {dimension_numbers = #tpu.dot_dimension_numbers<[1], [0], [0], [1], [0, 0, 1, 1], [], []>} : vector<8x32xf32>, vector<32x128xf32>, vector<8x128xf32> -> vector<8x128xf32>
    %185 = arith.addf %183, %184 : vector<8x128xf32>
    %186 = vector.extract_strided_slice %185 {offsets = [0, 0], sizes = [8, 32], strides = [1, 1]} : vector<8x128xf32> to vector<8x32xf32>
    %187 = arith.negf %186 : vector<8x32xf32>
    %188 = math.exp %187 : vector<8x32xf32>
    %cst_48 = arith.constant 1.000000e+00 : f32
    %189 = vector.broadcast %cst_48 : f32 to vector<8x32xf32>
    %190 = arith.addf %189, %188 : vector<8x32xf32>
    %191 = arith.divf %189, %190 : vector<8x32xf32>
    %192 = vector.extract_strided_slice %185 {offsets = [0, 32], sizes = [8, 32], strides = [1, 1]} : vector<8x128xf32> to vector<8x32xf32>
    %193 = arith.negf %192 : vector<8x32xf32>
    %194 = math.exp %193 : vector<8x32xf32>
    %cst_49 = arith.constant 1.000000e+00 : f32
    %195 = vector.broadcast %cst_49 : f32 to vector<8x32xf32>
    %196 = arith.addf %195, %194 : vector<8x32xf32>
    %197 = arith.divf %195, %196 : vector<8x32xf32>
    %198 = vector.extract_strided_slice %185 {offsets = [0, 64], sizes = [8, 32], strides = [1, 1]} : vector<8x128xf32> to vector<8x32xf32>
    %199 = math.tanh %198 : vector<8x32xf32>
    %200 = vector.extract_strided_slice %185 {offsets = [0, 96], sizes = [8, 32], strides = [1, 1]} : vector<8x128xf32> to vector<8x32xf32>
    %201 = arith.negf %200 : vector<8x32xf32>
    %202 = math.exp %201 : vector<8x32xf32>
    %cst_50 = arith.constant 1.000000e+00 : f32
    %203 = vector.broadcast %cst_50 : f32 to vector<8x32xf32>
    %204 = arith.addf %203, %202 : vector<8x32xf32>
    %205 = arith.divf %203, %204 : vector<8x32xf32>
    %206 = arith.mulf %197, %180 : vector<8x32xf32>
    %207 = arith.mulf %191, %199 : vector<8x32xf32>
    %208 = arith.addf %206, %207 : vector<8x32xf32>
    %209 = math.tanh %208 : vector<8x32xf32>
    %210 = arith.mulf %205, %209 : vector<8x32xf32>
    %c8_i32_51 = arith.constant 8 : i32
    %211 = arith.muli %arg1, %c8_i32_51 : i32
    %212 = arith.addi %211, %c5_i32 : i32
    %c8_i32_52 = arith.constant 8 : i32
    %213 = arith.cmpi slt, %212, %c8_i32_52 : i32
    %214 = arith.select %213, %210, %179 : vector<8x32xf32>
    %215 = arith.select %213, %208, %180 : vector<8x32xf32>
    %c6_i32 = arith.constant 6 : i32
    %216 = arith.index_cast %c6_i32 : i32 to index
    %c0_53 = arith.constant 0 : index
    %c0_54 = arith.constant 0 : index
    %217 = vector.load %arg2[%216, %c0_53, %c0_54] : memref<8x8x128xf32, #tpu.memory_space<vmem>>, vector<1x8x128xf32>
    %218 = vector.shape_cast %217 : vector<1x8x128xf32> to vector<8x128xf32>
    %cst_55 = arith.constant dense<0.000000e+00> : vector<8x128xf32>
    %219 = tpu.matmul %214, %3, %cst_55 {dimension_numbers = #tpu.dot_dimension_numbers<[1], [0], [0], [1], [0, 0, 1, 1], [], []>} : vector<8x32xf32>, vector<32x128xf32>, vector<8x128xf32> -> vector<8x128xf32>
    %220 = arith.addf %218, %219 : vector<8x128xf32>
    %221 = vector.extract_strided_slice %220 {offsets = [0, 0], sizes = [8, 32], strides = [1, 1]} : vector<8x128xf32> to vector<8x32xf32>
    %222 = arith.negf %221 : vector<8x32xf32>
    %223 = math.exp %222 : vector<8x32xf32>
    %cst_56 = arith.constant 1.000000e+00 : f32
    %224 = vector.broadcast %cst_56 : f32 to vector<8x32xf32>
    %225 = arith.addf %224, %223 : vector<8x32xf32>
    %226 = arith.divf %224, %225 : vector<8x32xf32>
    %227 = vector.extract_strided_slice %220 {offsets = [0, 32], sizes = [8, 32], strides = [1, 1]} : vector<8x128xf32> to vector<8x32xf32>
    %228 = arith.negf %227 : vector<8x32xf32>
    %229 = math.exp %228 : vector<8x32xf32>
    %cst_57 = arith.constant 1.000000e+00 : f32
    %230 = vector.broadcast %cst_57 : f32 to vector<8x32xf32>
    %231 = arith.addf %230, %229 : vector<8x32xf32>
    %232 = arith.divf %230, %231 : vector<8x32xf32>
    %233 = vector.extract_strided_slice %220 {offsets = [0, 64], sizes = [8, 32], strides = [1, 1]} : vector<8x128xf32> to vector<8x32xf32>
    %234 = math.tanh %233 : vector<8x32xf32>
    %235 = vector.extract_strided_slice %220 {offsets = [0, 96], sizes = [8, 32], strides = [1, 1]} : vector<8x128xf32> to vector<8x32xf32>
    %236 = arith.negf %235 : vector<8x32xf32>
    %237 = math.exp %236 : vector<8x32xf32>
    %cst_58 = arith.constant 1.000000e+00 : f32
    %238 = vector.broadcast %cst_58 : f32 to vector<8x32xf32>
    %239 = arith.addf %238, %237 : vector<8x32xf32>
    %240 = arith.divf %238, %239 : vector<8x32xf32>
    %241 = arith.mulf %232, %215 : vector<8x32xf32>
    %242 = arith.mulf %226, %234 : vector<8x32xf32>
    %243 = arith.addf %241, %242 : vector<8x32xf32>
    %244 = math.tanh %243 : vector<8x32xf32>
    %245 = arith.mulf %240, %244 : vector<8x32xf32>
    %c8_i32_59 = arith.constant 8 : i32
    %246 = arith.muli %arg1, %c8_i32_59 : i32
    %247 = arith.addi %246, %c6_i32 : i32
    %c8_i32_60 = arith.constant 8 : i32
    %248 = arith.cmpi slt, %247, %c8_i32_60 : i32
    %249 = arith.select %248, %245, %214 : vector<8x32xf32>
    %250 = arith.select %248, %243, %215 : vector<8x32xf32>
    %c7_i32 = arith.constant 7 : i32
    %251 = arith.index_cast %c7_i32 : i32 to index
    %c0_61 = arith.constant 0 : index
    %c0_62 = arith.constant 0 : index
    %252 = vector.load %arg2[%251, %c0_61, %c0_62] : memref<8x8x128xf32, #tpu.memory_space<vmem>>, vector<1x8x128xf32>
    %253 = vector.shape_cast %252 : vector<1x8x128xf32> to vector<8x128xf32>
    %cst_63 = arith.constant dense<0.000000e+00> : vector<8x128xf32>
    %254 = tpu.matmul %249, %3, %cst_63 {dimension_numbers = #tpu.dot_dimension_numbers<[1], [0], [0], [1], [0, 0, 1, 1], [], []>} : vector<8x32xf32>, vector<32x128xf32>, vector<8x128xf32> -> vector<8x128xf32>
    %255 = arith.addf %253, %254 : vector<8x128xf32>
    %256 = vector.extract_strided_slice %255 {offsets = [0, 0], sizes = [8, 32], strides = [1, 1]} : vector<8x128xf32> to vector<8x32xf32>
    %257 = arith.negf %256 : vector<8x32xf32>
    %258 = math.exp %257 : vector<8x32xf32>
    %cst_64 = arith.constant 1.000000e+00 : f32
    %259 = vector.broadcast %cst_64 : f32 to vector<8x32xf32>
    %260 = arith.addf %259, %258 : vector<8x32xf32>
    %261 = arith.divf %259, %260 : vector<8x32xf32>
    %262 = vector.extract_strided_slice %255 {offsets = [0, 32], sizes = [8, 32], strides = [1, 1]} : vector<8x128xf32> to vector<8x32xf32>
    %263 = arith.negf %262 : vector<8x32xf32>
    %264 = math.exp %263 : vector<8x32xf32>
    %cst_65 = arith.constant 1.000000e+00 : f32
    %265 = vector.broadcast %cst_65 : f32 to vector<8x32xf32>
    %266 = arith.addf %265, %264 : vector<8x32xf32>
    %267 = arith.divf %265, %266 : vector<8x32xf32>
    %268 = vector.extract_strided_slice %255 {offsets = [0, 64], sizes = [8, 32], strides = [1, 1]} : vector<8x128xf32> to vector<8x32xf32>
    %269 = math.tanh %268 : vector<8x32xf32>
    %270 = vector.extract_strided_slice %255 {offsets = [0, 96], sizes = [8, 32], strides = [1, 1]} : vector<8x128xf32> to vector<8x32xf32>
    %271 = arith.negf %270 : vector<8x32xf32>
    %272 = math.exp %271 : vector<8x32xf32>
    %cst_66 = arith.constant 1.000000e+00 : f32
    %273 = vector.broadcast %cst_66 : f32 to vector<8x32xf32>
    %274 = arith.addf %273, %272 : vector<8x32xf32>
    %275 = arith.divf %273, %274 : vector<8x32xf32>
    %276 = arith.mulf %267, %250 : vector<8x32xf32>
    %277 = arith.mulf %261, %269 : vector<8x32xf32>
    %278 = arith.addf %276, %277 : vector<8x32xf32>
    %279 = math.tanh %278 : vector<8x32xf32>
    %280 = arith.mulf %275, %279 : vector<8x32xf32>
    %c8_i32_67 = arith.constant 8 : i32
    %281 = arith.muli %arg1, %c8_i32_67 : i32
    %282 = arith.addi %281, %c7_i32 : i32
    %c8_i32_68 = arith.constant 8 : i32
    %283 = arith.cmpi slt, %282, %c8_i32_68 : i32
    %284 = arith.select %283, %280, %249 : vector<8x32xf32>
    %285 = arith.select %283, %278, %250 : vector<8x32xf32>
    %c8_i32_69 = arith.constant 8 : i32
    %c0_70 = arith.constant 0 : index
    %c0_71 = arith.constant 0 : index
    %286 = vector.load %arg7[%c0_70, %c0_71] : memref<8x32xf32, #tpu.memory_space<vmem>>, vector<8x32xf32>
    tpu.vector_store %arg7[%c0_70, %c0_71], %284 {strides = array<i32>} : memref<8x32xf32, #tpu.memory_space<vmem>>, vector<8x32xf32>,
    %c0_72 = arith.constant 0 : index
    %c0_73 = arith.constant 0 : index
    %287 = vector.load %arg8[%c0_72, %c0_73] : memref<8x32xf32, #tpu.memory_space<vmem>>, vector<8x32xf32>
    tpu.vector_store %arg8[%c0_72, %c0_73], %285 {strides = array<i32>} : memref<8x32xf32, #tpu.memory_space<vmem>>, vector<8x32xf32>,
    %c0_i32_74 = arith.constant 0 : i32
    %288 = arith.cmpi eq, %arg1, %c0_i32_74 : i32
    %289 = arith.extui %288 : i1 to i32
    %c0_i32_75 = arith.constant 0 : i32
    %290 = arith.cmpi ne, %289, %c0_i32_75 : i32
    scf.if %290 {
      %c0_76 = arith.constant 0 : index
      %c0_77 = arith.constant 0 : index
      %291 = vector.load %arg4[%c0_76, %c0_77] : memref<32x5xf32, #tpu.memory_space<vmem>>, vector<32x5xf32>
      %cst_78 = arith.constant dense<0.000000e+00> : vector<8x5xf32>
      %292 = tpu.matmul %284, %291, %cst_78 {dimension_numbers = #tpu.dot_dimension_numbers<[1], [0], [0], [1], [0, 0, 1, 1], [], []>} : vector<8x32xf32>, vector<32x5xf32>, vector<8x5xf32> -> vector<8x5xf32>
      %c0_79 = arith.constant 0 : index
      %c0_80 = arith.constant 0 : index
      %293 = vector.load %arg5[%c0_79, %c0_80] : memref<1x5xf32, #tpu.memory_space<vmem>>, vector<1x5xf32>
      %294 = vector.broadcast %293 : vector<1x5xf32> to vector<8x5xf32>
      %295 = arith.addf %292, %294 : vector<8x5xf32>
      %c0_81 = arith.constant 0 : index
      %c0_82 = arith.constant 0 : index
      %296 = vector.load %arg6[%c0_81, %c0_82] : memref<8x5xf32, #tpu.memory_space<vmem>>, vector<8x5xf32>
      tpu.vector_store %arg6[%c0_81, %c0_82], %295 {strides = array<i32>} : memref<8x5xf32, #tpu.memory_space<vmem>>, vector<8x5xf32>,
    } else {
    }
    return
  }
  func.func @transform_0(%arg0: i32, %arg1: i32) -> (i32, i32, i32) {
    %c0_i32 = arith.constant 0 : i32
    %c0_i32_0 = arith.constant 0 : i32
    return %arg1, %arg0, %c0_i32 : i32, i32, i32
  }
  func.func @transform_1(%arg0: i32, %arg1: i32) -> (i32, i32) {
    %c0_i32 = arith.constant 0 : i32
    %c0_i32_0 = arith.constant 0 : i32
    %c0_i32_1 = arith.constant 0 : i32
    return %c0_i32, %c0_i32_0 : i32, i32
  }
  func.func @transform_2(%arg0: i32, %arg1: i32) -> (i32, i32) {
    %c0_i32 = arith.constant 0 : i32
    %c0_i32_0 = arith.constant 0 : i32
    %c0_i32_1 = arith.constant 0 : i32
    return %c0_i32, %c0_i32_0 : i32, i32
  }
  func.func @transform_3(%arg0: i32, %arg1: i32) -> (i32, i32) {
    %c0_i32 = arith.constant 0 : i32
    %c0_i32_0 = arith.constant 0 : i32
    %c0_i32_1 = arith.constant 0 : i32
    return %c0_i32, %c0_i32_0 : i32, i32
  }
  func.func @transform_4(%arg0: i32, %arg1: i32) -> (i32, i32) {
    %c0_i32 = arith.constant 0 : i32
    %c0_i32_0 = arith.constant 0 : i32
    return %arg0, %c0_i32 : i32, i32
  }
}

</mosaic_0001>

<llo_original>
// kernel: move_predict_forward.2
$region0: #{move_predict_forward.2}
  #allocation0 [shape = 'u32[]', space=smem, size = 0x4, offset = 0x4, fixed_abs, tag = 'smem constant byte address 0x4 - core index']
  #allocation1 [shape = 'u32[72,128]{1,0:T(1,128)}', space=vmem, size = 0x9000, scoped, tag = 'internal scratch']
  %s0 = inlined_call_operand.vmem [shape: bf16[64,128], index: 0, kind: input, shape index: {}]
  %s1 = inlined_call_operand.vmem [shape: bf16[64,41], index: 1, kind: input, shape index: {}]
  %s2 = inlined_call_operand.vmem [shape: bf16[41,24], index: 2, kind: input, shape index: {}]
  %s3 = inlined_call_operand.vmem [shape: f32[1,24], index: 3, kind: input, shape index: {}]
  %s4 = inlined_call_operand.vmem [shape: bf16[24,128], index: 4, kind: input, shape index: {}]
  %s5 = inlined_call_operand.vmem [shape: f32[1,128], index: 5, kind: input, shape index: {}]
  %s6 = inlined_call_operand.vmem [shape: f32[64,128], index: 6, kind: output, shape index: {}]
  %s7 = sld [smem:[#allocation0]]
  $region34: #{move_predict_forward.2} parent=0
    _
  %s9 = ssub.s32 1, %s7
  %s10 = scalar_select 0, %s9, %s7
  // Predicated region
  $region2: #{move_predict_forward.2} parent=0 // pred_check
    _
  $region3: #{move_predict_forward.2} parent=0 // pred_check_branch
    %12 = sbr.rel (0) target = $region5
  $region4: #{move_predict_forward.2} parent=0 // pred_region
    _
  $region5: #{move_predict_forward.2} parent=0 // pred_fallthru
    _
  // Predicated region
  $region6: #{move_predict_forward.2} parent=0 // pred_check
    _
  $region7: #{move_predict_forward.2} parent=0 // pred_check_branch
    %14 = sbr.rel (0) target = $region9
  $region8: #{move_predict_forward.2} parent=0 // pred_region
    _
  $region9: #{move_predict_forward.2} parent=0 // pred_fallthru
    _
  // Predicated region
  $region10: #{move_predict_forward.2} parent=0 // pred_check
    _
  $region11: #{move_predict_forward.2} parent=0 // pred_check_branch
    %16 = sbr.rel (0) target = $region13
  $region12: #{move_predict_forward.2} parent=0 // pred_region
    _
  $region13: #{move_predict_forward.2} parent=0 // pred_fallthru
    _
  // Predicated region
  $region14: #{move_predict_forward.2} parent=0 // pred_check
    _
  $region15: #{move_predict_forward.2} parent=0 // pred_check_branch
    %18 = sbr.rel (0) target = $region17
  $region16: #{move_predict_forward.2} parent=0 // pred_region
    _
  $region17: #{move_predict_forward.2} parent=0 // pred_fallthru
    _
  // Predicated region
  $region18: #{move_predict_forward.2} parent=0 // pred_check
    _
  $region19: #{move_predict_forward.2} parent=0 // pred_check_branch
    %20 = sbr.rel (0) target = $region21
  $region20: #{move_predict_forward.2} parent=0 // pred_region
    _
  $region21: #{move_predict_forward.2} parent=0 // pred_fallthru
    _
  // Predicated region
  $region22: #{move_predict_forward.2} parent=0 // pred_check
    _
  $region23: #{move_predict_forward.2} parent=0 // pred_check_branch
    %22 = sbr.rel (0) target = $region25
  $region24: #{move_predict_forward.2} parent=0 // pred_region
    _
  $region25: #{move_predict_forward.2} parent=0 // pred_fallthru
    _
  %v24 = vld [vmem:[%s1] sm:$0xf]
  %v25 = vld [vmem:[%s1 + $0x4] sm:$0xf]
  %v26 = vld [vmem:[%s1 + $0x8] sm:$0xf]
  %v27 = vld [vmem:[%s1 + $0xc] sm:$0xf]
  %v28 = vld [vmem:[%s1 + $0x10] sm:$0xf]
  %v29 = vld [vmem:[%s1 + $0x14] sm:$0xf]
  %v30 = vld [vmem:[%s1 + $0x18] sm:$0xf]
  %v31 = vld [vmem:[%s1 + $0x1c] sm:$0xf]
  %v32 = vld [vmem:[%s2] sm:$0xf]
  %v33 = vld [vmem:[%s2 + $0x4] sm:$0xf]
  %v34 = vld [vmem:[%s2 + $0x8] sm:$0xf]
  %v35 = vld [vmem:[%s2 + $0xc] sm:$0xf]
  %v36 = vld [vmem:[%s2 + $0x10] sm:$0xf]
  %v37 = vld [vmem:[%s2 + $0x14] sm:$0x1]
  %v38 = vld [vmem:[%s3] sm:$0x1]
  %v40 = vperm.slane %v38, 0
  %v50 = vunpack.c.l.b16 %v24
  %v51 = vunpack.c.l.b16 %v25
  %v52 = vunpack.c.l.b16 %v26
  %v53 = vunpack.c.l.b16 %v27
  %v54 = vunpack.c.l.b16 %v28
  %v55 = vunpack.c.l.b16 %v29
  %v56 = vunpack.c.l.b16 %v30
  %v57 = vunpack.c.l.b16 %v31
  %v58 = vpack.c.b16 %v51, %v50
  %v59 = vpack.c.b16 %v53, %v52
  %v60 = vpack.c.b16 %v55, %v54
  %v61 = vpack.c.b16 %v57, %v56
  %v68 = vunpack.c.l.b16 %v32
  %v69 = vunpack.c.l.b16 %v33
  %v70 = vunpack.c.l.b16 %v34
  %v71 = vunpack.c.l.b16 %v35
  %v72 = vunpack.c.l.b16 %v36
  %v73 = vunpack.c.l.b16 %v37
  %v74 = vpack.c.b16 %v69, %v68
  %v75 = vpack.c.b16 %v71, %v70
  %v76 = vpack.c.b16 %v73, %v72
  %vm79 = vcmask 334848
  %v81 = vsel %vm79, %v58, 0
  %v84 = vsel %vm79, %v59, 0
  %v87 = vsel %vm79, %v60, 0
  %v90 = vsel %vm79, %v61, 0
  %vm92 = vcmask 1043456
  %vm93 = vcmask 1044480
  %v94 = vsel %vm92, 4294967295, 65535
  %v95 = vsel %vm93, %v94, 0
  %v97 = vand.u32 %v76, %v95
  %99 = vmatpush.bf16.msra.mxu0 0
  %100 = vmatpush.bf16.msra.mxu0 0
  %101 = vmatpush.bf16.msra.mxu0 0
  %102 = vmatpush.bf16.msra.mxu0 0
  %103 = vmatpush.bf16.msra.mxu0 0
  %104 = vmatpush.bf16.msra.mxu0 %v97
  %105 = vmatpush.bf16.msra.mxu0 %v75
  %106 = vmatpush.bf16.msra.mxu0 %v74
  %107 = vmatmul.bf16.gmra.mxu0 %v81
  %v108 = vpop.f32.mrf.mxu0
  %v109 = vadd.f32 %v40, %v108
  %v110 = vpop.f32.mrf.mxu0
  %v111 = vadd.f32 %v40, %v110
  %112 = vmatmul.bf16.gmra.mxu0 %v84
  %v113 = vpop.f32.mrf.mxu0
  %v114 = vadd.f32 %v40, %v113
  %v115 = vpop.f32.mrf.mxu0
  %v116 = vadd.f32 %v40, %v115
  %117 = vmatmul.bf16.gmra.mxu0 %v87
  %v118 = vpop.f32.mrf.mxu0
  %v119 = vadd.f32 %v40, %v118
  %v120 = vpop.f32.mrf.mxu0
  %v121 = vadd.f32 %v40, %v120
  %122 = vmatmul.bf16.gmra.mxu0 %v90
  %v123 = vpop.f32.mrf.mxu0
  %v124 = vadd.f32 %v40, %v123
  %v125 = vpop.f32.mrf.mxu0
  %v126 = vadd.f32 %v40, %v125
  %127 = vdwg.mxu0
  %v128 = vmax.f32 %v109, 0.0
  %v129 = vmax.f32 %v111, 0.0
  %v130 = vmax.f32 %v114, 0.0
  %v131 = vmax.f32 %v116, 0.0
  %v132 = vmax.f32 %v119, 0.0
  %v133 = vmax.f32 %v121, 0.0
  %v134 = vmax.f32 %v124, 0.0
  %v135 = vmax.f32 %v126, 0.0
  %v136 = vpack.c.bf16 %v129, %v128
  %v137 = vpack.c.bf16 %v131, %v130
  %v138 = vpack.c.bf16 %v133, %v132
  %v139 = vpack.c.bf16 %v135, %v134
  %v140 = vld [vmem:[%s0] sm:$0xf]
  %v141 = vld [vmem:[%s0 + $0x4] sm:$0xf]
  %v142 = vld [vmem:[%s0 + $0x8] sm:$0xf]
  %v143 = vld [vmem:[%s0 + $0xc] sm:$0xf]
  %v144 = vld [vmem:[%s0 + $0x10] sm:$0xf]
  %v145 = vld [vmem:[%s0 + $0x14] sm:$0xf]
  %v146 = vld [vmem:[%s0 + $0x18] sm:$0xf]
  %v147 = vld [vmem:[%s0 + $0x1c] sm:$0xf]
  %v148 = vunpack.c.l.bf16 %v140
  %v149 = vunpack.c.l.bf16 %v141
  %v150 = vunpack.c.l.bf16 %v142
  %v151 = vunpack.c.l.bf16 %v143
  %v152 = vunpack.c.l.bf16 %v144
  %v153 = vunpack.c.l.bf16 %v145
  %v154 = vunpack.c.l.bf16 %v146
  %v155 = vunpack.c.l.bf16 %v147
  %v156 = vld [vmem:[%s4] sm:$0xf]
  %v157 = vld [vmem:[%s4 + $0x4] sm:$0xf]
  %v158 = vld [vmem:[%s4 + $0x8] sm:$0xf]
  %v162 = vunpack.c.l.b16 %v156
  %v163 = vunpack.c.l.b16 %v157
  %v164 = vunpack.c.l.b16 %v158
  %v165 = vpack.c.b16 %v163, %v162
  %v166 = vpack.c.b16 %v164, %v164
  %vm168 = vcmask 195584
  %v170 = vsel %vm168, %v136, 0
  %v173 = vsel %vm168, %v137, 0
  %v176 = vsel %vm168, %v138, 0
  %v179 = vsel %vm168, %v139, 0
  %v182 = vsel %vm92, %v166, 0
  %184 = vmatpush.bf16.msra.mxu0 0
  %185 = vmatpush.bf16.msra.mxu0 0
  %186 = vmatpush.bf16.msra.mxu0 0
  %187 = vmatpush.bf16.msra.mxu0 0
  %188 = vmatpush.bf16.msra.mxu0 0
  %189 = vmatpush.bf16.msra.mxu0 0
  %190 = vmatpush.bf16.msra.mxu0 %v182
  %191 = vmatpush.bf16.msra.mxu0 %v165
  %192 = vmatmul.bf16.gmra.mxu0 %v170
  %v193 = vpop.f32.mrf.mxu0
  %v194 = vadd.f32 0.0, %v193
  %v195 = vpop.f32.mrf.mxu0
  %v196 = vadd.f32 0.0, %v195
  %197 = vmatmul.bf16.gmra.mxu0 %v173
  %v198 = vpop.f32.mrf.mxu0
  %v199 = vadd.f32 0.0, %v198
  %v200 = vpop.f32.mrf.mxu0
  %v201 = vadd.f32 0.0, %v200
  %202 = vmatmul.bf16.gmra.mxu0 %v176
  %v203 = vpop.f32.mrf.mxu0
  %v204 = vadd.f32 0.0, %v203
  %v205 = vpop.f32.mrf.mxu0
  %v206 = vadd.f32 0.0, %v205
  %207 = vmatmul.bf16.gmra.mxu0 %v179
  %v208 = vpop.f32.mrf.mxu0
  %v209 = vadd.f32 0.0, %v208
  %v210 = vpop.f32.mrf.mxu0
  %v211 = vadd.f32 0.0, %v210
  %212 = vdwg.mxu0
  %v213 = vadd.f32 %v148, %v194
  %v214 = vadd.f32 %v149, %v196
  %v215 = vadd.f32 %v150, %v199
  %v216 = vadd.f32 %v151, %v201
  %v217 = vadd.f32 %v152, %v204
  %v218 = vadd.f32 %v153, %v206
  %v219 = vadd.f32 %v154, %v209
  %v220 = vadd.f32 %v155, %v211
  %v221 = vld [vmem:[%s5] sm:$0x1]
  %v223 = vperm.slane %v221, 0
  %v225 = vadd.f32 %v213, %v223
  %v226 = vadd.f32 %v214, %v223
  %v227 = vadd.f32 %v215, %v223
  %v228 = vadd.f32 %v216, %v223
  %v229 = vadd.f32 %v217, %v223
  %v230 = vadd.f32 %v218, %v223
  %v231 = vadd.f32 %v219, %v223
  %v232 = vadd.f32 %v220, %v223
  %233 = vst [vmem:[%s6] sm:$0xff] %v225
  %234 = vst [vmem:[%s6 + $0x8] sm:$0xff] %v226
  %235 = vst [vmem:[%s6 + $0x10] sm:$0xff] %v227
  %236 = vst [vmem:[%s6 + $0x18] sm:$0xff] %v228
  %237 = vst [vmem:[%s6 + $0x20] sm:$0xff] %v229
  %238 = vst [vmem:[%s6 + $0x28] sm:$0xff] %v230
  %239 = vst [vmem:[%s6 + $0x30] sm:$0xff] %v231
  %240 = vst [vmem:[%s6 + $0x38] sm:$0xff] %v232
  // Predicated region
  $region26: #{move_predict_forward.2} parent=0 // pred_check
    _
  $region27: #{move_predict_forward.2} parent=0 // pred_check_branch
    %242 = sbr.rel (0) target = $region29
  $region28: #{move_predict_forward.2} parent=0 // pred_region
    _
  $region29: #{move_predict_forward.2} parent=0 // pred_fallthru
    _
  // Predicated region
  $region30: #{move_predict_forward.2} parent=0 // pred_check
    _
  $region31: #{move_predict_forward.2} parent=0 // pred_check_branch
    %244 = sbr.rel (0) target = $region33
  $region32: #{move_predict_forward.2} parent=0 // pred_region
    _
  $region33: #{move_predict_forward.2} parent=0 // pred_fallthru
    _

// kernel: move_predict_forward.3
$region0: #{move_predict_forward.3}
  #allocation0 [shape = 'u32[]', space=smem, size = 0x4, offset = 0x4, fixed_abs, tag = 'smem constant byte address 0x4 - core index']
  #allocation1 [shape = 'u32[72,128]{1,0:T(1,128)}', space=vmem, size = 0x9000, scoped, tag = 'internal scratch']
  #allocation2 [shape = 'f32[8,32]{1,0:T(8,128)}', space=vmem, size = 0x1000, scoped, tag = 'scratch operand']
  #allocation3 [shape = 'f32[8,32]{1,0:T(8,128)}', space=vmem, size = 0x1000, scoped, tag = 'scratch operand']
  %s0 = inlined_call_operand.vmem [shape: f32[8,8,128], index: 0, kind: input, shape index: {}]
  %s1 = inlined_call_operand.vmem [shape: f32[32,128], index: 1, kind: input, shape index: {}]
  %s2 = inlined_call_operand.vmem [shape: f32[32,5], index: 2, kind: input, shape index: {}]
  %s3 = inlined_call_operand.vmem [shape: f32[1,5], index: 3, kind: input, shape index: {}]
  %s4 = inlined_call_operand.vmem [shape: f32[8,5], index: 4, kind: output, shape index: {}]
  %s5 = sld [smem:[#allocation0]]
  $region34: #{move_predict_forward.3} parent=0
    _
  %s7 = ssub.s32 1, %s5
  %s8 = scalar_select 0, %s7, %s5
  // Predicated region
  $region2: #{move_predict_forward.3} parent=0 // pred_check
    _
  $region3: #{move_predict_forward.3} parent=0 // pred_check_branch
    %10 = sbr.rel (0) target = $region5
  $region4: #{move_predict_forward.3} parent=0 // pred_region
    _
  $region5: #{move_predict_forward.3} parent=0 // pred_fallthru
    _
  // Predicated region
  $region6: #{move_predict_forward.3} parent=0 // pred_check
    _
  $region7: #{move_predict_forward.3} parent=0 // pred_check_branch
    %12 = sbr.rel (0) target = $region9
  $region8: #{move_predict_forward.3} parent=0 // pred_region
    _
  $region9: #{move_predict_forward.3} parent=0 // pred_fallthru
    _
  // Predicated region
  $region10: #{move_predict_forward.3} parent=0 // pred_check
    _
  $region11: #{move_predict_forward.3} parent=0 // pred_check_branch
    %14 = sbr.rel (0) target = $region13
  $region12: #{move_predict_forward.3} parent=0 // pred_region
    _
  $region13: #{move_predict_forward.3} parent=0 // pred_fallthru
    _
  // Predicated region
  $region14: #{move_predict_forward.3} parent=0 // pred_check
    _
  $region15: #{move_predict_forward.3} parent=0 // pred_check_branch
    %16 = sbr.rel (0) target = $region17
  $region16: #{move_predict_forward.3} parent=0 // pred_region
    _
  $region17: #{move_predict_forward.3} parent=0 // pred_fallthru
    _
  %p17 = scmp.eq.s32.totalorder 0, 0
  // Predicated region
  $region18: #{move_predict_forward.3} parent=0 // pred_check
    %p18 = pneg %p17
  $region19: #{move_predict_forward.3} parent=0 // pred_check_branch
    %20 = sbr.rel (%p18) target = $region21
  $region20: #{move_predict_forward.3} parent=0 // pred_region
    %vm21 = vcmask 261120
    %22 = vst.msk [vmem:[#allocation2] sm:$0xff] %vm21, 0.0
    %23 = vst.msk [vmem:[#allocation3] sm:$0xff] %vm21, 0.0
  $region21: #{move_predict_forward.3} parent=0 // pred_fallthru
    _
  %v24 = vld [vmem:[%s1] sm:$0xff]
  %v25 = vld [vmem:[%s1 + $0x8] sm:$0xff]
  %v26 = vld [vmem:[%s1 + $0x10] sm:$0xff]
  %v27 = vld [vmem:[%s1 + $0x18] sm:$0xff]
  %v28 = vld [vmem:[#allocation2] sm:$0xff]
  %v29 = vld [vmem:[#allocation3] sm:$0xff]
  %v30 = vld [vmem:[%s0] sm:$0xff]
  %vm31 = vcmask 261120
  %v33 = vsel %vm31, %v28, 0
  %35 = vmatpush.msra.mxu0 0.0
  %36 = vmatpush.msra.mxu0 0.0
  %37 = vmatpush.msra.mxu0 0.0
  %38 = vmatpush.msra.mxu0 0.0
  %39 = vmatpush.msra.mxu0 0.0
  %40 = vmatpush.msra.mxu0 0.0
  %41 = vmatpush.msra.mxu0 0.0
  %42 = vmatpush.msra.mxu0 0.0
  %43 = vmatpush.msra.mxu0 0.0
  %44 = vmatpush.msra.mxu0 0.0
  %45 = vmatpush.msra.mxu0 0.0
  %46 = vmatpush.msra.mxu0 0.0
  %47 = vmatpush.msra.mxu0 %v27
  %48 = vmatpush.msra.mxu0 %v26
  %49 = vmatpush.msra.mxu0 %v25
  %50 = vmatpush.msra.mxu0 %v24
  %51 = vmatmul.f32.gmra.mxu0 %v33
  %v52 = vpop.f32.mrf.mxu0
  %v53 = vadd.f32 0.0, %v52
  %54 = vdwg.mxu0
  %v55 = vadd.f32 %v30, %v53
  %v56 = vxor.u32 %v55, 2147483648
  %v57 = vmul.f32 %v56, 1.442695
  %v58 = vpow.pop %v57
  %v59 = vadd.f32 %v58, 1.0
  %v60 = vrcp.pop %v59
  %v61 = vmul.f32 %v59, %v60
  %v62 = vsub.f32 1.0, %v61
  %v63 = vmul.f32 %v60, %v62
  %v64 = vadd.f32 %v60, %v63
  %vm65 = vweird.f32 %v59
  %vm66 = vweird.f32 %v60
  %vm67 = vmor %vm65, %vm66
  %v68 = vsel %vm67, %v60, %v64
  %v69 = vand.u32 2147483647, %v59
  %vm70 = vcmp.eq.f32.partialorder %v69, 8.507059e+37
  %v71 = vand.u32 %v59, 2147483648
  %v72 = vor.u32 1.1754944e-38, %v71
  %v73 = vsel %vm70, %v72, %v68
  %v74 = vmul.f32 1.0, %v73
  %v75 = vtanh.pop %v55
  %77 = vrot.lane.b32.xlu0 %v29, 32
  %v78 = vpop.permute.xlu0 %77
  %v80 = vmul.f32 %v74, %v78
  %82 = vrot.lane.b32.xlu0 %v75, 64
  %v83 = vpop.permute.xlu0 %82
  %v85 = vmul.f32 %v74, %v83
  %87 = vrot.lane.b32.xlu0 %v85, 32
  %v88 = vpop.permute.xlu0 %87
  %v90 = vadd.f32 %v80, %v88
  %v91 = vtanh.pop %v90
  %93 = vrot.lane.b32.xlu0 %v91, 64
  %v94 = vpop.permute.xlu0 %93
  %v96 = vmul.f32 %v74, %v94
  %s97 = smul.u32 0, 8
  %p98 = scmp.lt.s32.totalorder %s97, 8
  %s99 = scalar_select %p98, 1, 0
  %v100 = vstv %s99
  %vm101 = vcmp.eq.s32.totalorder %v100, 1
  %102 = vrot.lane.b32.xlu0 %v28, 96
  %v103 = vpop.permute.xlu0 %102
  %v105 = vsel %vm101, %v96, %v103
  %v106 = vsel %vm101, %v90, %v78
  %s107 = scalar_lea.vmem %s0, 8
  %v108 = vld [vmem:[%s107] sm:$0xff]
  %110 = vrot.lane.b32.xlu0 %v105, 32
  %v111 = vpop.permute.xlu0 %110
  %v112 = vsel %vm31, %v111, 0
  %114 = vmatpush.msra.mxu0 0.0
  %115 = vmatpush.msra.mxu0 0.0
  %116 = vmatpush.msra.mxu0 0.0
  %117 = vmatpush.msra.mxu0 0.0
  %118 = vmatpush.msra.mxu0 0.0
  %119 = vmatpush.msra.mxu0 0.0
  %120 = vmatpush.msra.mxu0 0.0
  %121 = vmatpush.msra.mxu0 0.0
  %122 = vmatpush.msra.mxu0 0.0
  %123 = vmatpush.msra.mxu0 0.0
  %124 = vmatpush.msra.mxu0 0.0
  %125 = vmatpush.msra.mxu0 0.0
  %126 = vmatpush.msra.mxu0 %v27
  %127 = vmatpush.msra.mxu0 %v26
  %128 = vmatpush.msra.mxu0 %v25
  %129 = vmatpush.msra.mxu0 %v24
  %130 = vmatmul.f32.gmra.mxu0 %v112
  %v131 = vpop.f32.mrf.mxu0
  %v132 = vadd.f32 0.0, %v131
  %133 = vdwg.mxu0
  %v134 = vadd.f32 %v108, %v132
  %v135 = vxor.u32 %v134, 2147483648
  %v136 = vmul.f32 %v135, 1.442695
  %v137 = vpow.pop %v136
  %v138 = vadd.f32 %v137, 1.0
  %v139 = vrcp.pop %v138
  %v140 = vmul.f32 %v138, %v139
  %v141 = vsub.f32 1.0, %v140
  %v142 = vmul.f32 %v139, %v141
  %v143 = vadd.f32 %v139, %v142
  %vm144 = vweird.f32 %v138
  %vm145 = vweird.f32 %v139
  %vm146 = vmor %vm144, %vm145
  %v147 = vsel %vm146, %v139, %v143
  %v148 = vand.u32 2147483647, %v138
  %vm149 = vcmp.eq.f32.partialorder %v148, 8.507059e+37
  %v150 = vand.u32 %v138, 2147483648
  %v151 = vor.u32 1.1754944e-38, %v150
  %v152 = vsel %vm149, %v151, %v147
  %v153 = vmul.f32 1.0, %v152
  %v154 = vtanh.pop %v134
  %v155 = vmul.f32 %v153, %v106
  %157 = vrot.lane.b32.xlu0 %v154, 64
  %v158 = vpop.permute.xlu0 %157
  %v160 = vmul.f32 %v153, %v158
  %162 = vrot.lane.b32.xlu0 %v160, 32
  %v163 = vpop.permute.xlu0 %162
  %v165 = vadd.f32 %v155, %v163
  %v166 = vtanh.pop %v165
  %168 = vrot.lane.b32.xlu0 %v166, 64
  %v169 = vpop.permute.xlu0 %168
  %v171 = vmul.f32 %v153, %v169
  %s172 = sadd.s32 %s97, 1
  %p173 = scmp.lt.s32.totalorder %s172, 8
  %s174 = scalar_select %p173, 1, 0
  %v175 = vstv %s174
  %vm176 = vcmp.eq.s32.totalorder %v175, 1
  %v177 = vsel %vm176, %v171, %v105
  %v178 = vsel %vm176, %v165, %v106
  %s179 = scalar_lea.vmem %s0, 16
  %v180 = vld [vmem:[%s179] sm:$0xff]
  %182 = vrot.lane.b32.xlu0 %v177, 32
  %v183 = vpop.permute.xlu0 %182
  %v184 = vsel %vm31, %v183, 0
  %186 = vmatpush.msra.mxu0 0.0
  %187 = vmatpush.msra.mxu0 0.0
  %188 = vmatpush.msra.mxu0 0.0
  %189 = vmatpush.msra.mxu0 0.0
  %190 = vmatpush.msra.mxu0 0.0
  %191 = vmatpush.msra.mxu0 0.0
  %192 = vmatpush.msra.mxu0 0.0
  %193 = vmatpush.msra.mxu0 0.0
  %194 = vmatpush.msra.mxu0 0.0
  %195 = vmatpush.msra.mxu0 0.0
  %196 = vmatpush.msra.mxu0 0.0
  %197 = vmatpush.msra.mxu0 0.0
  %198 = vmatpush.msra.mxu0 %v27
  %199 = vmatpush.msra.mxu0 %v26
  %200 = vmatpush.msra.mxu0 %v25
  %201 = vmatpush.msra.mxu0 %v24
  %202 = vmatmul.f32.gmra.mxu0 %v184
  %v203 = vpop.f32.mrf.mxu0
  %v204 = vadd.f32 0.0, %v203
  %205 = vdwg.mxu0
  %v206 = vadd.f32 %v180, %v204
  %v207 = vxor.u32 %v206, 2147483648
  %v208 = vmul.f32 %v207, 1.442695
  %v209 = vpow.pop %v208
  %v210 = vadd.f32 %v209, 1.0
  %v211 = vrcp.pop %v210
  %v212 = vmul.f32 %v210, %v211
  %v213 = vsub.f32 1.0, %v212
  %v214 = vmul.f32 %v211, %v213
  %v215 = vadd.f32 %v211, %v214
  %vm216 = vweird.f32 %v210
  %vm217 = vweird.f32 %v211
  %vm218 = vmor %vm216, %vm217
  %v219 = vsel %vm218, %v211, %v215
  %v220 = vand.u32 2147483647, %v210
  %vm221 = vcmp.eq.f32.partialorder %v220, 8.507059e+37
  %v222 = vand.u32 %v210, 2147483648
  %v223 = vor.u32 1.1754944e-38, %v222
  %v224 = vsel %vm221, %v223, %v219
  %v225 = vmul.f32 1.0, %v224
  %v226 = vtanh.pop %v206
  %v227 = vmul.f32 %v225, %v178
  %229 = vrot.lane.b32.xlu0 %v226, 64
  %v230 = vpop.permute.xlu0 %229
  %v232 = vmul.f32 %v225, %v230
  %234 = vrot.lane.b32.xlu0 %v232, 32
  %v235 = vpop.permute.xlu0 %234
  %v237 = vadd.f32 %v227, %v235
  %v238 = vtanh.pop %v237
  %240 = vrot.lane.b32.xlu0 %v238, 64
  %v241 = vpop.permute.xlu0 %240
  %v243 = vmul.f32 %v225, %v241
  %s244 = sadd.s32 %s97, 2
  %p245 = scmp.lt.s32.totalorder %s244, 8
  %s246 = scalar_select %p245, 1, 0
  %v247 = vstv %s246
  %vm248 = vcmp.eq.s32.totalorder %v247, 1
  %v249 = vsel %vm248, %v243, %v177
  %v250 = vsel %vm248, %v237, %v178
  %s251 = scalar_lea.vmem %s0, 24
  %v252 = vld [vmem:[%s251] sm:$0xff]
  %254 = vrot.lane.b32.xlu0 %v249, 32
  %v255 = vpop.permute.xlu0 %254
  %v256 = vsel %vm31, %v255, 0
  %258 = vmatpush.msra.mxu0 0.0
  %259 = vmatpush.msra.mxu0 0.0
  %260 = vmatpush.msra.mxu0 0.0
  %261 = vmatpush.msra.mxu0 0.0
  %262 = vmatpush.msra.mxu0 0.0
  %263 = vmatpush.msra.mxu0 0.0
  %264 = vmatpush.msra.mxu0 0.0
  %265 = vmatpush.msra.mxu0 0.0
  %266 = vmatpush.msra.mxu0 0.0
  %267 = vmatpush.msra.mxu0 0.0
  %268 = vmatpush.msra.mxu0 0.0
  %269 = vmatpush.msra.mxu0 0.0
  %270 = vmatpush.msra.mxu0 %v27
  %271 = vmatpush.msra.mxu0 %v26
  %272 = vmatpush.msra.mxu0 %v25
  %273 = vmatpush.msra.mxu0 %v24
  %274 = vmatmul.f32.gmra.mxu0 %v256
  %v275 = vpop.f32.mrf.mxu0
  %v276 = vadd.f32 0.0, %v275
  %277 = vdwg.mxu0
  %v278 = vadd.f32 %v252, %v276
  %v279 = vxor.u32 %v278, 2147483648
  %v280 = vmul.f32 %v279, 1.442695
  %v281 = vpow.pop %v280
  %v282 = vadd.f32 %v281, 1.0
  %v283 = vrcp.pop %v282
  %v284 = vmul.f32 %v282, %v283
  %v285 = vsub.f32 1.0, %v284
  %v286 = vmul.f32 %v283, %v285
  %v287 = vadd.f32 %v283, %v286
  %vm288 = vweird.f32 %v282
  %vm289 = vweird.f32 %v283
  %vm290 = vmor %vm288, %vm289
  %v291 = vsel %vm290, %v283, %v287
  %v292 = vand.u32 2147483647, %v282
  %vm293 = vcmp.eq.f32.partialorder %v292, 8.507059e+37
  %v294 = vand.u32 %v282, 2147483648
  %v295 = vor.u32 1.1754944e-38, %v294
  %v296 = vsel %vm293, %v295, %v291
  %v297 = vmul.f32 1.0, %v296
  %v298 = vtanh.pop %v278
  %v299 = vmul.f32 %v297, %v250
  %301 = vrot.lane.b32.xlu0 %v298, 64
  %v302 = vpop.permute.xlu0 %301
  %v304 = vmul.f32 %v297, %v302
  %306 = vrot.lane.b32.xlu0 %v304, 32
  %v307 = vpop.permute.xlu0 %306
  %v309 = vadd.f32 %v299, %v307
  %v310 = vtanh.pop %v309
  %312 = vrot.lane.b32.xlu0 %v310, 64
  %v313 = vpop.permute.xlu0 %312
  %v315 = vmul.f32 %v297, %v313
  %s316 = sadd.s32 %s97, 3
  %p317 = scmp.lt.s32.totalorder %s316, 8
  %s318 = scalar_select %p317, 1, 0
  %v319 = vstv %s318
  %vm320 = vcmp.eq.s32.totalorder %v319, 1
  %v321 = vsel %vm320, %v315, %v249
  %v322 = vsel %vm320, %v309, %v250
  %s323 = scalar_lea.vmem %s0, 32
  %v324 = vld [vmem:[%s323] sm:$0xff]
  %326 = vrot.lane.b32.xlu0 %v321, 32
  %v327 = vpop.permute.xlu0 %326
  %v328 = vsel %vm31, %v327, 0
  %330 = vmatpush.msra.mxu0 0.0
  %331 = vmatpush.msra.mxu0 0.0
  %332 = vmatpush.msra.mxu0 0.0
  %333 = vmatpush.msra.mxu0 0.0
  %334 = vmatpush.msra.mxu0 0.0
  %335 = vmatpush.msra.mxu0 0.0
  %336 = vmatpush.msra.mxu0 0.0
  %337 = vmatpush.msra.mxu0 0.0
  %338 = vmatpush.msra.mxu0 0.0
  %339 = vmatpush.msra.mxu0 0.0
  %340 = vmatpush.msra.mxu0 0.0
  %341 = vmatpush.msra.mxu0 0.0
  %342 = vmatpush.msra.mxu0 %v27
  %343 = vmatpush.msra.mxu0 %v26
  %344 = vmatpush.msra.mxu0 %v25
  %345 = vmatpush.msra.mxu0 %v24
  %346 = vmatmul.f32.gmra.mxu0 %v328
  %v347 = vpop.f32.mrf.mxu0
  %v348 = vadd.f32 0.0, %v347
  %349 = vdwg.mxu0
  %v350 = vadd.f32 %v324, %v348
  %v351 = vxor.u32 %v350, 2147483648
  %v352 = vmul.f32 %v351, 1.442695
  %v353 = vpow.pop %v352
  %v354 = vadd.f32 %v353, 1.0
  %v355 = vrcp.pop %v354
  %v356 = vmul.f32 %v354, %v355
  %v357 = vsub.f32 1.0, %v356
  %v358 = vmul.f32 %v355, %v357
  %v359 = vadd.f32 %v355, %v358
  %vm360 = vweird.f32 %v354
  %vm361 = vweird.f32 %v355
  %vm362 = vmor %vm360, %vm361
  %v363 = vsel %vm362, %v355, %v359
  %v364 = vand.u32 2147483647, %v354
  %vm365 = vcmp.eq.f32.partialorder %v364, 8.507059e+37
  %v366 = vand.u32 %v354, 2147483648
  %v367 = vor.u32 1.1754944e-38, %v366
  %v368 = vsel %vm365, %v367, %v363
  %v369 = vmul.f32 1.0, %v368
  %v370 = vtanh.pop %v350
  %v371 = vmul.f32 %v369, %v322
  %373 = vrot.lane.b32.xlu0 %v370, 64
  %v374 = vpop.permute.xlu0 %373
  %v376 = vmul.f32 %v369, %v374
  %378 = vrot.lane.b32.xlu0 %v376, 32
  %v379 = vpop.permute.xlu0 %378
  %v381 = vadd.f32 %v371, %v379
  %v382 = vtanh.pop %v381
  %384 = vrot.lane.b32.xlu0 %v382, 64
  %v385 = vpop.permute.xlu0 %384
  %v387 = vmul.f32 %v369, %v385
  %s388 = sadd.s32 %s97, 4
  %p389 = scmp.lt.s32.totalorder %s388, 8
  %s390 = scalar_select %p389, 1, 0
  %v391 = vstv %s390
  %vm392 = vcmp.eq.s32.totalorder %v391, 1
  %v393 = vsel %vm392, %v387, %v321
  %v394 = vsel %vm392, %v381, %v322
  %s395 = scalar_lea.vmem %s0, 40
  %v396 = vld [vmem:[%s395] sm:$0xff]
  %398 = vrot.lane.b32.xlu0 %v393, 32
  %v399 = vpop.permute.xlu0 %398
  %v400 = vsel %vm31, %v399, 0
  %402 = vmatpush.msra.mxu0 0.0
  %403 = vmatpush.msra.mxu0 0.0
  %404 = vmatpush.msra.mxu0 0.0
  %405 = vmatpush.msra.mxu0 0.0
  %406 = vmatpush.msra.mxu0 0.0
  %407 = vmatpush.msra.mxu0 0.0
  %408 = vmatpush.msra.mxu0 0.0
  %409 = vmatpush.msra.mxu0 0.0
  %410 = vmatpush.msra.mxu0 0.0
  %411 = vmatpush.msra.mxu0 0.0
  %412 = vmatpush.msra.mxu0 0.0
  %413 = vmatpush.msra.mxu0 0.0
  %414 = vmatpush.msra.mxu0 %v27
  %415 = vmatpush.msra.mxu0 %v26
  %416 = vmatpush.msra.mxu0 %v25
  %417 = vmatpush.msra.mxu0 %v24
  %418 = vmatmul.f32.gmra.mxu0 %v400
  %v419 = vpop.f32.mrf.mxu0
  %v420 = vadd.f32 0.0, %v419
  %421 = vdwg.mxu0
  %v422 = vadd.f32 %v396, %v420
  %v423 = vxor.u32 %v422, 2147483648
  %v424 = vmul.f32 %v423, 1.442695
  %v425 = vpow.pop %v424
  %v426 = vadd.f32 %v425, 1.0
  %v427 = vrcp.pop %v426
  %v428 = vmul.f32 %v426, %v427
  %v429 = vsub.f32 1.0, %v428
  %v430 = vmul.f32 %v427, %v429
  %v431 = vadd.f32 %v427, %v430
  %vm432 = vweird.f32 %v426
  %vm433 = vweird.f32 %v427
  %vm434 = vmor %vm432, %vm433
  %v435 = vsel %vm434, %v427, %v431
  %v436 = vand.u32 2147483647, %v426
  %vm437 = vcmp.eq.f32.partialorder %v436, 8.507059e+37
  %v438 = vand.u32 %v426, 2147483648
  %v439 = vor.u32 1.1754944e-38, %v438
  %v440 = vsel %vm437, %v439, %v435
  %v441 = vmul.f32 1.0, %v440
  %v442 = vtanh.pop %v422
  %v443 = vmul.f32 %v441, %v394
  %445 = vrot.lane.b32.xlu0 %v442, 64
  %v446 = vpop.permute.xlu0 %445
  %v448 = vmul.f32 %v441, %v446
  %450 = vrot.lane.b32.xlu0 %v448, 32
  %v451 = vpop.permute.xlu0 %450
  %v453 = vadd.f32 %v443, %v451
  %v454 = vtanh.pop %v453
  %456 = vrot.lane.b32.xlu0 %v454, 64
  %v457 = vpop.permute.xlu0 %456
  %v459 = vmul.f32 %v441, %v457
  %s460 = sadd.s32 %s97, 5
  %p461 = scmp.lt.s32.totalorder %s460, 8
  %s462 = scalar_select %p461, 1, 0
  %v463 = vstv %s462
  %vm464 = vcmp.eq.s32.totalorder %v463, 1
  %v465 = vsel %vm464, %v459, %v393
  %v466 = vsel %vm464, %v453, %v394
  %s467 = scalar_lea.vmem %s0, 48
  %v468 = vld [vmem:[%s467] sm:$0xff]
  %470 = vrot.lane.b32.xlu0 %v465, 32
  %v471 = vpop.permute.xlu0 %470
  %v472 = vsel %vm31, %v471, 0
  %474 = vmatpush.msra.mxu0 0.0
  %475 = vmatpush.msra.mxu0 0.0
  %476 = vmatpush.msra.mxu0 0.0
  %477 = vmatpush.msra.mxu0 0.0
  %478 = vmatpush.msra.mxu0 0.0
  %479 = vmatpush.msra.mxu0 0.0
  %480 = vmatpush.msra.mxu0 0.0
  %481 = vmatpush.msra.mxu0 0.0
  %482 = vmatpush.msra.mxu0 0.0
  %483 = vmatpush.msra.mxu0 0.0
  %484 = vmatpush.msra.mxu0 0.0
  %485 = vmatpush.msra.mxu0 0.0
  %486 = vmatpush.msra.mxu0 %v27
  %487 = vmatpush.msra.mxu0 %v26
  %488 = vmatpush.msra.mxu0 %v25
  %489 = vmatpush.msra.mxu0 %v24
  %490 = vmatmul.f32.gmra.mxu0 %v472
  %v491 = vpop.f32.mrf.mxu0
  %v492 = vadd.f32 0.0, %v491
  %493 = vdwg.mxu0
  %v494 = vadd.f32 %v468, %v492
  %v495 = vxor.u32 %v494, 2147483648
  %v496 = vmul.f32 %v495, 1.442695
  %v497 = vpow.pop %v496
  %v498 = vadd.f32 %v497, 1.0
  %v499 = vrcp.pop %v498
  %v500 = vmul.f32 %v498, %v499
  %v501 = vsub.f32 1.0, %v500
  %v502 = vmul.f32 %v499, %v501
  %v503 = vadd.f32 %v499, %v502
  %vm504 = vweird.f32 %v498
  %vm505 = vweird.f32 %v499
  %vm506 = vmor %vm504, %vm505
  %v507 = vsel %vm506, %v499, %v503
  %v508 = vand.u32 2147483647, %v498
  %vm509 = vcmp.eq.f32.partialorder %v508, 8.507059e+37
  %v510 = vand.u32 %v498, 2147483648
  %v511 = vor.u32 1.1754944e-38, %v510
  %v512 = vsel %vm509, %v511, %v507
  %v513 = vmul.f32 1.0, %v512
  %v514 = vtanh.pop %v494
  %v515 = vmul.f32 %v513, %v466
  %517 = vrot.lane.b32.xlu0 %v514, 64
  %v518 = vpop.permute.xlu0 %517
  %v520 = vmul.f32 %v513, %v518
  %522 = vrot.lane.b32.xlu0 %v520, 32
  %v523 = vpop.permute.xlu0 %522
  %v525 = vadd.f32 %v515, %v523
  %v526 = vtanh.pop %v525
  %528 = vrot.lane.b32.xlu0 %v526, 64
  %v529 = vpop.permute.xlu0 %528
  %v531 = vmul.f32 %v513, %v529
  %s532 = sadd.s32 %s97, 6
  %p533 = scmp.lt.s32.totalorder %s532, 8
  %s534 = scalar_select %p533, 1, 0
  %v535 = vstv %s534
  %vm536 = vcmp.eq.s32.totalorder %v535, 1
  %v537 = vsel %vm536, %v531, %v465
  %v538 = vsel %vm536, %v525, %v466
  %s539 = scalar_lea.vmem %s0, 56
  %v540 = vld [vmem:[%s539] sm:$0xff]
  %542 = vrot.lane.b32.xlu0 %v537, 32
  %v543 = vpop.permute.xlu0 %542
  %v544 = vsel %vm31, %v543, 0
  %546 = vmatpush.msra.mxu0 0.0
  %547 = vmatpush.msra.mxu0 0.0
  %548 = vmatpush.msra.mxu0 0.0
  %549 = vmatpush.msra.mxu0 0.0
  %550 = vmatpush.msra.mxu0 0.0
  %551 = vmatpush.msra.mxu0 0.0
  %552 = vmatpush.msra.mxu0 0.0
  %553 = vmatpush.msra.mxu0 0.0
  %554 = vmatpush.msra.mxu0 0.0
  %555 = vmatpush.msra.mxu0 0.0
  %556 = vmatpush.msra.mxu0 0.0
  %557 = vmatpush.msra.mxu0 0.0
  %558 = vmatpush.msra.mxu0 %v27
  %559 = vmatpush.msra.mxu0 %v26
  %560 = vmatpush.msra.mxu0 %v25
  %561 = vmatpush.msra.mxu0 %v24
  %562 = vmatmul.f32.gmra.mxu0 %v544
  %v563 = vpop.f32.mrf.mxu0
  %v564 = vadd.f32 0.0, %v563
  %565 = vdwg.mxu0
  %v566 = vadd.f32 %v540, %v564
  %v567 = vxor.u32 %v566, 2147483648
  %v568 = vmul.f32 %v567, 1.442695
  %v569 = vpow.pop %v568
  %v570 = vadd.f32 %v569, 1.0
  %v571 = vrcp.pop %v570
  %v572 = vmul.f32 %v570, %v571
  %v573 = vsub.f32 1.0, %v572
  %v574 = vmul.f32 %v571, %v573
  %v575 = vadd.f32 %v571, %v574
  %vm576 = vweird.f32 %v570
  %vm577 = vweird.f32 %v571
  %vm578 = vmor %vm576, %vm577
  %v579 = vsel %vm578, %v571, %v575
  %v580 = vand.u32 2147483647, %v570
  %vm581 = vcmp.eq.f32.partialorder %v580, 8.507059e+37
  %v582 = vand.u32 %v570, 2147483648
  %v583 = vor.u32 1.1754944e-38, %v582
  %v584 = vsel %vm581, %v583, %v579
  %v585 = vmul.f32 1.0, %v584
  %v586 = vtanh.pop %v566
  %v587 = vmul.f32 %v585, %v538
  %589 = vrot.lane.b32.xlu0 %v586, 64
  %v590 = vpop.permute.xlu0 %589
  %v592 = vmul.f32 %v585, %v590
  %594 = vrot.lane.b32.xlu0 %v592, 32
  %v595 = vpop.permute.xlu0 %594
  %v597 = vadd.f32 %v587, %v595
  %v598 = vtanh.pop %v597
  %600 = vrot.lane.b32.xlu0 %v598, 64
  %v601 = vpop.permute.xlu0 %600
  %v603 = vmul.f32 %v585, %v601
  %s604 = sadd.s32 %s97, 7
  %p605 = scmp.lt.s32.totalorder %s604, 8
  %s606 = scalar_select %p605, 1, 0
  %v607 = vstv %s606
  %vm608 = vcmp.eq.s32.totalorder %v607, 1
  %v609 = vsel %vm608, %v603, %v537
  %v610 = vsel %vm608, %v597, %v538
  %612 = vrot.lane.b32.xlu0 %v609, 32
  %v613 = vpop.permute.xlu0 %612
  %615 = vst.msk [vmem:[#allocation2] sm:$0xff] %vm31, %v613
  %617 = vrot.lane.b32.xlu0 %v610, 96
  %v618 = vpop.permute.xlu0 %617
  %620 = vst.msk [vmem:[#allocation3] sm:$0xff] %vm31, %v618
  // Predicated region
  $region22: #{move_predict_forward.3} parent=0 // pred_check
    %p621 = pneg %p17
  $region23: #{move_predict_forward.3} parent=0 // pred_check_branch
    %623 = sbr.rel (%p621) target = $region25
  $region24: #{move_predict_forward.3} parent=0 // pred_region
    %v624 = vld [vmem:[%s2] sm:$0xff]
    %v625 = vld [vmem:[%s2 + $0x8] sm:$0xff]
    %v626 = vld [vmem:[%s2 + $0x10] sm:$0xff]
    %v627 = vld [vmem:[%s2 + $0x18] sm:$0xff]
    %v628 = vld [vmem:[%s3] sm:$0x1]
    %v630 = vperm.slane %v628, 0
    %v632 = vsel %vm31, %v613, 0
    %634 = vmatpush.msra.mxu0 0.0
    %635 = vmatpush.msra.mxu0 0.0
    %636 = vmatpush.msra.mxu0 0.0
    %637 = vmatpush.msra.mxu0 0.0
    %638 = vmatpush.msra.mxu0 0.0
    %639 = vmatpush.msra.mxu0 0.0
    %640 = vmatpush.msra.mxu0 0.0
    %641 = vmatpush.msra.mxu0 0.0
    %642 = vmatpush.msra.mxu0 0.0
    %643 = vmatpush.msra.mxu0 0.0
    %644 = vmatpush.msra.mxu0 0.0
    %645 = vmatpush.msra.mxu0 0.0
    %646 = vmatpush.msra.mxu0 %v627
    %647 = vmatpush.msra.mxu0 %v626
    %648 = vmatpush.msra.mxu0 %v625
    %649 = vmatpush.msra.mxu0 %v624
    %650 = vmatmul.f32.gmra.mxu0 %v632
    %v651 = vpop.f32.mrf.mxu0
    %v652 = vadd.f32 %v630, %v651
    %653 = vdwg.mxu0
    %vm654 = vcmask 39936
    %655 = vst.msk [vmem:[%s4] sm:$0xff] %vm654, %v652
  $region25: #{move_predict_forward.3} parent=0 // pred_fallthru
    _
  // Predicated region
  $region26: #{move_predict_forward.3} parent=0 // pred_check
    _
  $region27: #{move_predict_forward.3} parent=0 // pred_check_branch
    %657 = sbr.rel (0) target = $region29
  $region28: #{move_predict_forward.3} parent=0 // pred_region
    _
  $region29: #{move_predict_forward.3} parent=0 // pred_fallthru
    _
  // Predicated region
  $region30: #{move_predict_forward.3} parent=0 // pred_check
    _
  $region31: #{move_predict_forward.3} parent=0 // pred_check_branch
    %659 = sbr.rel (0) target = $region33
  $region32: #{move_predict_forward.3} parent=0 // pred_region
    _
  $region33: #{move_predict_forward.3} parent=0 // pred_fallthru
    _

</llo_original>
